<compile_context>
chip_gen: v6e
topology: v6e:2x2x1
jax: 0.10.0
libtpu: 0.0.40
codegen_flags: <defaults>
</compile_context>

<pallas_src>
import functools

import jax
import jax.numpy as jnp
from jax.experimental import pallas as pl
from jax.experimental.pallas import tpu as pltpu


def _round_up(x, m):
    return ((x + m - 1) // m) * m


def vgae_kernel(a_ref, x_ref, w1t_ref, w2t_ref, wht_ref, bh_ref, eps_ref,
                ahat_ref, mu_ref, logvar_ref, zmean_ref, *, n_real):
    """One block of Gb graphs per grid step.

    a_ref:    (Gb, NR, NR)   bf16  zero-padded normalized adjacency
    x_ref:    (Gb, NR, DP)   bf16  zero-padded node features
    w1t_ref:  (DP, HP)       bf16  pre-transposed, zero-padded W1
    w2t_ref:  (HP, HP)       bf16  pre-transposed, zero-padded W2
    wht_ref:  (HP, 2*LP)     bf16  [Wmu^T | Wlv^T] fused head weight
    bh_ref:   (1, 2*LP)      f32   [b_mu | b_lv] fused head bias
    eps_ref:  (Gb, NR, LP)   bf16  reparameterization noise
    outputs:  A_hat (bf16), mu/logvar (f32), per-graph Z row-mean (f32)
    """
    Gb, NR, _ = a_ref.shape
    DP = x_ref.shape[-1]
    HP = w1t_ref.shape[-1]
    LP = wht_ref.shape[-1] // 2

    A = a_ref[...]                                               # (Gb,NR,NR) bf16

    # ---- Encoder layer 1: relu((A @ X) @ W1^T), bias=False ----
    AX = jnp.einsum('gnm,gmd->gnd', A, x_ref[...],
                    preferred_element_type=jnp.float32)          # per-graph
    H = jnp.dot(AX.astype(jnp.bfloat16).reshape(Gb * NR, DP), w1t_ref[...],
                preferred_element_type=jnp.float32)              # flattened M
    H = jnp.maximum(H, 0.0).astype(jnp.bfloat16)                 # (Gb*NR, HP)
    # dropout p = 0.0 -> identity

    # ---- Encoder layer 2: relu((A @ H) @ W2^T) ----
    AH = jnp.einsum('gnm,gmh->gnh', A, H.reshape(Gb, NR, HP),
                    preferred_element_type=jnp.float32)
    H = jnp.dot(AH.astype(jnp.bfloat16).reshape(Gb * NR, HP), w2t_ref[...],
                preferred_element_type=jnp.float32)
    H = jnp.maximum(H, 0.0).astype(jnp.bfloat16)                 # (Gb*NR, HP)

    # ---- Fused variational head: one (HP, 2*LP)-wide matmul ----
    head = jnp.dot(H, wht_ref[...],
                   preferred_element_type=jnp.float32) + bh_ref[...]
    mu = head[:, :LP]                                            # lane-tile split
    logvar = head[:, LP:]
    std = jnp.exp(0.5 * logvar)                                  # EUP, f32
    eps = eps_ref[...].astype(jnp.float32).reshape(Gb * NR, LP)
    Z = mu + eps * std        # padded latent cols of Z stay exactly zero

    mu_ref[...] = mu.reshape(Gb, NR, LP)
    logvar_ref[...] = logvar.reshape(Gb, NR, LP)

    # ---- Graph readout: mean of Z over the real N rows (mask padded rows,
    #      which carry the broadcast bias) ----
    Zg = Z.reshape(Gb, NR, LP)
    if NR != n_real:
        rows = jax.lax.broadcasted_iota(jnp.int32, (Gb, NR, LP), 1)
        zsum_in = jnp.where(rows < n_real, Zg, 0.0)
    else:
        zsum_in = Zg
    zmean_ref[...] = jnp.sum(zsum_in, axis=1, keepdims=True) * (1.0 / n_real)

    # ---- Decoder: sigmoid(Z @ Z^T) per graph (same NT einsum pattern as
    #      flash attention's QK^T; no explicit transpose emitted) ----
    Zb = Zg.astype(jnp.bfloat16)
    zzt = jnp.einsum('gnl,gml->gnm', Zb, Zb,
                     preferred_element_type=jnp.float32)
    ahat_ref[...] = jax.nn.sigmoid(zzt).astype(ahat_ref.dtype)   # bf16 store


@functools.partial(jax.jit, static_argnames=("gb",))
def vgae_forward_batched(A_norm, X, params, eps, gb=2):
    """Batched VGAE forward.  A_norm: (G,N,N), X: (G,N,D), eps: (G,N,L)."""
    G, N, _ = A_norm.shape
    in_dim = X.shape[-1]
    hidden = params["w1"].shape[0]
    latent = params["wmu"].shape[0]

    # Node dim: sublane padding only (16 covers bf16 and f32 tiles).
    # Feature dims are lane/contraction dims of the weight matmuls -> 128.
    NR = _round_up(N, 16)
    DP = _round_up(in_dim, 128)
    HP = _round_up(hidden, 128)
    LP = _round_up(latent, 128)
    GP = _round_up(G, gb)

    bf = jnp.bfloat16
    A_p = jnp.pad(A_norm, ((0, GP - G), (0, NR - N), (0, NR - N))).astype(bf)
    X_p = jnp.pad(X, ((0, GP - G), (0, NR - N), (0, DP - in_dim))).astype(bf)
    eps_p = jnp.pad(eps, ((0, GP - G), (0, NR - N), (0, LP - latent))).astype(bf)

    # One-time wrapper-side transpose + pad of weights (no .T in the kernel).
    w1t = jnp.pad(params["w1"].T, ((0, DP - in_dim), (0, HP - hidden))).astype(bf)
    w2t = jnp.pad(params["w2"].T, ((0, HP - hidden), (0, HP - hidden))).astype(bf)
    wmut = jnp.pad(params["wmu"].T, ((0, HP - hidden), (0, LP - latent)))
    wlvt = jnp.pad(params["wlv"].T, ((0, HP - hidden), (0, LP - latent)))
    wht = jnp.concatenate([wmut, wlvt], axis=1).astype(bf)        # (HP, 2*LP)
    bh = jnp.concatenate([jnp.pad(params["bmu"], ((0, LP - latent),)),
                          jnp.pad(params["blv"], ((0, LP - latent),))]
                         ).reshape(1, 2 * LP).astype(jnp.float32)

    def per_block(*tail):
        return pl.BlockSpec((gb,) + tail, lambda g: (g, 0, 0))

    def shared(shape):
        return pl.BlockSpec(shape, lambda g: (0,) * len(shape))

    kernel = functools.partial(vgae_kernel, n_real=N)

    ahat_p, mu_p, logvar_p, zmean_p = pl.pallas_call(
        kernel,
        grid=(GP // gb,),
        in_specs=[
            per_block(NR, NR),       # A_norm
            per_block(NR, DP),       # X
            shared((DP, HP)),        # W1^T
            shared((HP, HP)),        # W2^T
            shared((HP, 2 * LP)),    # [Wmu^T | Wlv^T]
            shared((1, 2 * LP)),     # [b_mu | b_lv]
            per_block(NR, LP),       # eps
        ],
        out_specs=(
            per_block(NR, NR),       # A_hat (bf16)
            per_block(NR, LP),       # mu
            per_block(NR, LP),       # logvar
            per_block(1, LP),        # Z row-mean per graph
        ),
        out_shape=(
            jax.ShapeDtypeStruct((GP, NR, NR), jnp.bfloat16),
            jax.ShapeDtypeStruct((GP, NR, LP), jnp.float32),
            jax.ShapeDtypeStruct((GP, NR, LP), jnp.float32),
            jax.ShapeDtypeStruct((GP, 1, LP), jnp.float32),
        ),
        compiler_params=pltpu.CompilerParams(
            dimension_semantics=("parallel",)),
    )(A_p, X_p, w1t, w2t, wht, bh, eps_p)

    # Slice padded outputs back to logical shapes.
    A_hat = ahat_p[:G, :N, :N]
    mu = mu_p[:G, :N, :latent]
    logvar = logvar_p[:G, :N, :latent]

    # 1-unit classifier head: tiny scalar epilogue kept in XLA.
    zG = zmean_p[:G, 0, :latent]                                  # (G, latent)
    p = jax.nn.sigmoid(zG @ params["wcls"].T + params["bcls"])[:, 0]

    return A_hat, mu, logvar, p


def vgae_forward(A_norm, X, params, eps):
    """Single-graph forward matching the PyTorch module's signature."""
    A_hat, mu, logvar, p = vgae_forward_batched(
        A_norm[None], X[None], params, eps[None])
    return A_hat[0], mu[0], logvar[0], p[0]       # p -> scalar, like .squeeze()


def init_params(key, in_dim, hidden_dim, latent_dim):
    ks = jax.random.split(key, 8)
    s = 0.1
    return {
        "w1":   s * jax.random.normal(ks[0], (hidden_dim, in_dim), jnp.float32),
        "w2":   s * jax.random.normal(ks[1], (hidden_dim, hidden_dim), jnp.float32),
        "wmu":  s * jax.random.normal(ks[2], (latent_dim, hidden_dim), jnp.float32),
        "bmu":  s * jax.random.normal(ks[3], (latent_dim,), jnp.float32),
        "wlv":  s * jax.random.normal(ks[4], (latent_dim, hidden_dim), jnp.float32),
        "blv":  s * jax.random.normal(ks[5], (latent_dim,), jnp.float32),
        "wcls": s * jax.random.normal(ks[6], (1, latent_dim), jnp.float32),
        "bcls": s * jax.random.normal(ks[7], (1,), jnp.float32),
    }


if __name__ == "__main__":
    G, N, in_dim, hidden_dim, latent_dim = 4, 64, 32, 64, 64

    key = jax.random.PRNGKey(0)
    k_adj, k_x, k_par, k_eps = jax.random.split(key, 4)

    # Symmetric normalized adjacencies: D^-1/2 (A + I) D^-1/2 per graph.
    raw = jax.random.uniform(k_adj, (G, N, N)) < 0.1
    A = jnp.logical_or(raw, jnp.swapaxes(raw, -1, -2)).astype(jnp.float32)
    A = A + jnp.eye(N, dtype=jnp.float32)[None]
    d_inv_sqrt = 1.0 / jnp.sqrt(jnp.sum(A, axis=-1))
    A_norm = A * d_inv_sqrt[:, :, None] * d_inv_sqrt[:, None, :]

    X = jax.random.normal(k_x, (G, N, in_dim), jnp.float32)
    params = init_params(k_par, in_dim, hidden_dim, latent_dim)
    eps = jax.random.normal(k_eps, (G, N, latent_dim), jnp.float32)

    # Batched fused kernel: Gb=2 graphs per grid step -> grid=(2,).
    A_hat, mu, logvar, p = vgae_forward_batched(A_norm, X, params, eps)
    jax.block_until_ready((A_hat, mu, logvar, p))
    assert A_hat.shape == (G, N, N)
    assert mu.shape == (G, N, latent_dim)
    assert logvar.shape == (G, N, latent_dim)
    assert p.shape == (G,)

    # Single-graph path (module-parity API); exercises graph padding (G=1->2).
    A_hat0, mu0, logvar0, p0 = vgae_forward(A_norm[0], X[0], params, eps[0])
    jax.block_until_ready((A_hat0, mu0, logvar0, p0))
    assert A_hat0.shape == (N, N) and p0.shape == ()

    # Pure-JAX reference (tolerances account for bf16 MXU operands + bf16 eps).
    def ref_forward(Ag, Xg, prm, e):
        H = jnp.maximum((Ag @ Xg) @ prm["w1"].T, 0.0)
        H = jnp.maximum((Ag @ H) @ prm["w2"].T, 0.0)
        m = H @ prm["wmu"].T + prm["bmu"]
        lv = H @ prm["wlv"].T + prm["blv"]
        Z = m + e * jnp.exp(0.5 * lv)
        Ah = jax.nn.sigmoid(Z @ Z.T)
        pr = jax.nn.sigmoid(jnp.mean(Z, axis=0) @ prm["wcls"].T + prm["bcls"])
        return Ah, m, lv, pr.squeeze()

    rA, rm, rlv, rp = jax.vmap(ref_forward, in_axes=(0, 0, None, 0))(
        A_norm, X, params, eps)

    assert float(jnp.max(jnp.abs(mu - rm))) < 0.05
    assert float(jnp.max(jnp.abs(logvar - rlv))) < 0.05
    assert float(jnp.max(jnp.abs(A_hat.astype(jnp.float32) - rA))) < 0.3
    assert float(jnp.max(jnp.abs(p - rp))) < 0.05

    # Single-graph path against graph 0 of the reference.
    assert float(jnp.max(jnp.abs(mu0 - rm[0]))) < 0.05
    assert float(jnp.max(jnp.abs(A_hat0.astype(jnp.float32) - rA[0]))) < 0.3
    assert float(jnp.abs(p0 - rp[0])) < 0.05

    print("KERNEL_OK")
</pallas_src>

<mosaic_0001>
module attributes {stable_mosaic.version = 11 : i64} {
  func.func @vgae_kernel(%arg0: i32, %arg1: memref<2x64x64xbf16, #tpu.memory_space<vmem>>, %arg2: memref<2x64x128xbf16, #tpu.memory_space<vmem>>, %arg3: memref<128x128xbf16, #tpu.memory_space<vmem>>, %arg4: memref<128x128xbf16, #tpu.memory_space<vmem>>, %arg5: memref<128x256xbf16, #tpu.memory_space<vmem>>, %arg6: memref<1x256xf32, #tpu.memory_space<vmem>>, %arg7: memref<2x64x128xbf16, #tpu.memory_space<vmem>>, %arg8: memref<2x64x64xbf16, #tpu.memory_space<vmem>>, %arg9: memref<2x64x128xf32, #tpu.memory_space<vmem>>, %arg10: memref<2x64x128xf32, #tpu.memory_space<vmem>>, %arg11: memref<2x1x128xf32, #tpu.memory_space<vmem>>) attributes {dimension_semantics = [#tpu.dimension_semantics<parallel>], iteration_bounds = array<i64: 2>, scalar_prefetch = 0 : i64, scratch_operands = 0 : i64, tpu.core_type = #tpu.core_type<tc>, window_params = [{transform_indices = @transform_0, window_bounds = array<i64: 2, 64, 64>}, {transform_indices = @transform_1, window_bounds = array<i64: 2, 64, 128>}, {pipeline_mode = #tpu.pipeline_mode<synchronous>, transform_indices = @transform_2, window_bounds = array<i64: 128, 128>}, {pipeline_mode = #tpu.pipeline_mode<synchronous>, transform_indices = @transform_3, window_bounds = array<i64: 128, 128>}, {pipeline_mode = #tpu.pipeline_mode<synchronous>, transform_indices = @transform_4, window_bounds = array<i64: 128, 256>}, {pipeline_mode = #tpu.pipeline_mode<synchronous>, transform_indices = @transform_5, window_bounds = array<i64: 1, 256>}, {transform_indices = @transform_6, window_bounds = array<i64: 2, 64, 128>}, {transform_indices = @transform_7, window_bounds = array<i64: 2, 64, 64>}, {transform_indices = @transform_8, window_bounds = array<i64: 2, 64, 128>}, {transform_indices = @transform_9, window_bounds = array<i64: 2, 64, 128>}, {transform_indices = @transform_10, window_bounds = array<i64: 2, 1, 128>}]} {
    %c0 = arith.constant 0 : index
    %c0_0 = arith.constant 0 : index
    %c0_1 = arith.constant 0 : index
    %0 = vector.load %arg1[%c0, %c0_0, %c0_1] : memref<2x64x64xbf16, #tpu.memory_space<vmem>>, vector<2x64x64xbf16>
    %c0_2 = arith.constant 0 : index
    %c0_3 = arith.constant 0 : index
    %c0_4 = arith.constant 0 : index
    %1 = vector.load %arg2[%c0_2, %c0_3, %c0_4] : memref<2x64x128xbf16, #tpu.memory_space<vmem>>, vector<2x64x128xbf16>
    "tpu.trace_start"() <{level = 10 : i32, message = "gnm,gmd->gnd"}> : () -> ()
    %cst = arith.constant dense<0.000000e+00> : vector<2x64x128xf32>
    %2 = tpu.matmul %0, %1, %cst {dimension_numbers = #tpu.dot_dimension_numbers<[2], [1], [1], [2], [0, 0, 0, 1, 1, 2], [0], [0]>} : vector<2x64x64xbf16>, vector<2x64x128xbf16>, vector<2x64x128xf32> -> vector<2x64x128xf32>
    "tpu.trace_stop"() : () -> ()
    %3 = arith.truncf %2 : vector<2x64x128xf32> to vector<2x64x128xbf16>
    %4 = vector.shape_cast %3 : vector<2x64x128xbf16> to vector<128x128xbf16>
    %c0_5 = arith.constant 0 : index
    %c0_6 = arith.constant 0 : index
    %5 = vector.load %arg3[%c0_5, %c0_6] : memref<128x128xbf16, #tpu.memory_space<vmem>>, vector<128x128xbf16>
    %cst_7 = arith.constant dense<0.000000e+00> : vector<128x128xf32>
    %6 = tpu.matmul %4, %5, %cst_7 {dimension_numbers = #tpu.dot_dimension_numbers<[1], [0], [0], [1], [0, 0, 1, 1], [], []>} : vector<128x128xbf16>, vector<128x128xbf16>, vector<128x128xf32> -> vector<128x128xf32>
    %cst_8 = arith.constant 0.000000e+00 : f32
    %7 = vector.broadcast %cst_8 : f32 to vector<128x128xf32>
    %8 = arith.maximumf %6, %7 : vector<128x128xf32>
    %9 = arith.truncf %8 : vector<128x128xf32> to vector<128x128xbf16>
    %10 = vector.shape_cast %9 : vector<128x128xbf16> to vector<2x64x128xbf16>
    "tpu.trace_start"() <{level = 10 : i32, message = "gnm,gmh->gnh"}> : () -> ()
    %cst_9 = arith.constant dense<0.000000e+00> : vector<2x64x128xf32>
    %11 = tpu.matmul %0, %10, %cst_9 {dimension_numbers = #tpu.dot_dimension_numbers<[2], [1], [1], [2], [0, 0, 0, 1, 1, 2], [0], [0]>} : vector<2x64x64xbf16>, vector<2x64x128xbf16>, vector<2x64x128xf32> -> vector<2x64x128xf32>
    "tpu.trace_stop"() : () -> ()
    %12 = arith.truncf %11 : vector<2x64x128xf32> to vector<2x64x128xbf16>
    %13 = vector.shape_cast %12 : vector<2x64x128xbf16> to vector<128x128xbf16>
    %c0_10 = arith.constant 0 : index
    %c0_11 = arith.constant 0 : index
    %14 = vector.load %arg4[%c0_10, %c0_11] : memref<128x128xbf16, #tpu.memory_space<vmem>>, vector<128x128xbf16>
    %cst_12 = arith.constant dense<0.000000e+00> : vector<128x128xf32>
    %15 = tpu.matmul %13, %14, %cst_12 {dimension_numbers = #tpu.dot_dimension_numbers<[1], [0], [0], [1], [0, 0, 1, 1], [], []>} : vector<128x128xbf16>, vector<128x128xbf16>, vector<128x128xf32> -> vector<128x128xf32>
    %cst_13 = arith.constant 0.000000e+00 : f32
    %16 = vector.broadcast %cst_13 : f32 to vector<128x128xf32>
    %17 = arith.maximumf %15, %16 : vector<128x128xf32>
    %18 = arith.truncf %17 : vector<128x128xf32> to vector<128x128xbf16>
    %c0_14 = arith.constant 0 : index
    %c0_15 = arith.constant 0 : index
    %19 = vector.load %arg5[%c0_14, %c0_15] : memref<128x256xbf16, #tpu.memory_space<vmem>>, vector<128x256xbf16>
    %cst_16 = arith.constant dense<0.000000e+00> : vector<128x256xf32>
    %20 = tpu.matmul %18, %19, %cst_16 {dimension_numbers = #tpu.dot_dimension_numbers<[1], [0], [0], [1], [0, 0, 1, 1], [], []>} : vector<128x128xbf16>, vector<128x256xbf16>, vector<128x256xf32> -> vector<128x256xf32>
    %c0_17 = arith.constant 0 : index
    %c0_18 = arith.constant 0 : index
    %21 = vector.load %arg6[%c0_17, %c0_18] : memref<1x256xf32, #tpu.memory_space<vmem>>, vector<1x256xf32>
    %22 = vector.broadcast %21 : vector<1x256xf32> to vector<128x256xf32>
    %23 = arith.addf %20, %22 : vector<128x256xf32>
    %24 = vector.extract_strided_slice %23 {offsets = [0, 0], sizes = [128, 128], strides = [1, 1]} : vector<128x256xf32> to vector<128x128xf32>
    %25 = vector.extract_strided_slice %23 {offsets = [0, 128], sizes = [128, 128], strides = [1, 1]} : vector<128x256xf32> to vector<128x128xf32>
    %cst_19 = arith.constant 5.000000e-01 : f32
    %26 = vector.broadcast %cst_19 : f32 to vector<128x128xf32>
    %27 = arith.mulf %26, %25 : vector<128x128xf32>
    %28 = math.exp %27 : vector<128x128xf32>
    %c0_20 = arith.constant 0 : index
    %c0_21 = arith.constant 0 : index
    %c0_22 = arith.constant 0 : index
    %29 = vector.load %arg7[%c0_20, %c0_21, %c0_22] : memref<2x64x128xbf16, #tpu.memory_space<vmem>>, vector<2x64x128xbf16>
    %30 = arith.extf %29 : vector<2x64x128xbf16> to vector<2x64x128xf32>
    %31 = vector.shape_cast %30 : vector<2x64x128xf32> to vector<128x128xf32>
    %32 = arith.mulf %31, %28 : vector<128x128xf32>
    %33 = arith.addf %24, %32 : vector<128x128xf32>
    %34 = vector.shape_cast %24 : vector<128x128xf32> to vector<2x64x128xf32>
    %c0_23 = arith.constant 0 : index
    %c0_24 = arith.constant 0 : index
    %c0_25 = arith.constant 0 : index
    %35 = vector.load %arg9[%c0_23, %c0_24, %c0_25] : memref<2x64x128xf32, #tpu.memory_space<vmem>>, vector<2x64x128xf32>
    tpu.vector_store %arg9[%c0_23, %c0_24, %c0_25], %34 {strides = array<i32>} : memref<2x64x128xf32, #tpu.memory_space<vmem>>, vector<2x64x128xf32>,
    %36 = vector.shape_cast %25 : vector<128x128xf32> to vector<2x64x128xf32>
    %c0_26 = arith.constant 0 : index
    %c0_27 = arith.constant 0 : index
    %c0_28 = arith.constant 0 : index
    %37 = vector.load %arg10[%c0_26, %c0_27, %c0_28] : memref<2x64x128xf32, #tpu.memory_space<vmem>>, vector<2x64x128xf32>
    tpu.vector_store %arg10[%c0_26, %c0_27, %c0_28], %36 {strides = array<i32>} : memref<2x64x128xf32, #tpu.memory_space<vmem>>, vector<2x64x128xf32>,
    %38 = vector.shape_cast %33 : vector<128x128xf32> to vector<2x64x128xf32>
    %cst_29 = arith.constant dense<0.000000e+00> : vector<2x128xf32>
    %39 = vector.multi_reduction <add>, %38, %cst_29 [1] : vector<2x64x128xf32> to vector<2x128xf32>
    %40 = vector.shape_cast %39 : vector<2x128xf32> to vector<2x1x128xf32>
    %cst_30 = arith.constant 1.562500e-02 : f32
    %41 = vector.broadcast %cst_30 : f32 to vector<2x1x128xf32>
    %42 = arith.mulf %40, %41 : vector<2x1x128xf32>
    %c0_31 = arith.constant 0 : index
    %c0_32 = arith.constant 0 : index
    %c0_33 = arith.constant 0 : index
    %43 = vector.load %arg11[%c0_31, %c0_32, %c0_33] : memref<2x1x128xf32, #tpu.memory_space<vmem>>, vector<2x1x128xf32>
    tpu.vector_store %arg11[%c0_31, %c0_32, %c0_33], %42 {strides = array<i32>} : memref<2x1x128xf32, #tpu.memory_space<vmem>>, vector<2x1x128xf32>,
    %44 = arith.truncf %38 : vector<2x64x128xf32> to vector<2x64x128xbf16>
    "tpu.trace_start"() <{level = 10 : i32, message = "gnl,gml->gnm"}> : () -> ()
    %cst_34 = arith.constant dense<0.000000e+00> : vector<2x64x64xf32>
    %45 = tpu.matmul %44, %44, %cst_34 {dimension_numbers = #tpu.dot_dimension_numbers<[2], [2], [1], [1], [0, 0, 0, 1, 1, 1], [0], [0]>} : vector<2x64x128xbf16>, vector<2x64x128xbf16>, vector<2x64x64xf32> -> vector<2x64x64xf32>
    "tpu.trace_stop"() : () -> ()
    %46 = arith.negf %45 : vector<2x64x64xf32>
    %47 = math.exp %46 : vector<2x64x64xf32>
    %cst_35 = arith.constant 1.000000e+00 : f32
    %48 = vector.broadcast %cst_35 : f32 to vector<2x64x64xf32>
    %49 = arith.addf %48, %47 : vector<2x64x64xf32>
    %50 = arith.divf %48, %49 : vector<2x64x64xf32>
    %51 = arith.truncf %50 : vector<2x64x64xf32> to vector<2x64x64xbf16>
    %c0_36 = arith.constant 0 : index
    %c0_37 = arith.constant 0 : index
    %c0_38 = arith.constant 0 : index
    %52 = vector.load %arg8[%c0_36, %c0_37, %c0_38] : memref<2x64x64xbf16, #tpu.memory_space<vmem>>, vector<2x64x64xbf16>
    tpu.vector_store %arg8[%c0_36, %c0_37, %c0_38], %51 {strides = array<i32>} : memref<2x64x64xbf16, #tpu.memory_space<vmem>>, vector<2x64x64xbf16>,
    return
  }
  func.func @transform_0(%arg0: i32) -> (i32, i32, i32) {
    %c0_i32 = arith.constant 0 : i32
    %c0_i32_0 = arith.constant 0 : i32
    %c0_i32_1 = arith.constant 0 : i32
    return %arg0, %c0_i32, %c0_i32_0 : i32, i32, i32
  }
  func.func @transform_1(%arg0: i32) -> (i32, i32, i32) {
    %c0_i32 = arith.constant 0 : i32
    %c0_i32_0 = arith.constant 0 : i32
    %c0_i32_1 = arith.constant 0 : i32
    return %arg0, %c0_i32, %c0_i32_0 : i32, i32, i32
  }
  func.func @transform_2(%arg0: i32) -> (i32, i32) {
    %c0_i32 = arith.constant 0 : i32
    %c0_i32_0 = arith.constant 0 : i32
    %c0_i32_1 = arith.constant 0 : i32
    return %c0_i32, %c0_i32_0 : i32, i32
  }
  func.func @transform_3(%arg0: i32) -> (i32, i32) {
    %c0_i32 = arith.constant 0 : i32
    %c0_i32_0 = arith.constant 0 : i32
    %c0_i32_1 = arith.constant 0 : i32
    return %c0_i32, %c0_i32_0 : i32, i32
  }
  func.func @transform_4(%arg0: i32) -> (i32, i32) {
    %c0_i32 = arith.constant 0 : i32
    %c0_i32_0 = arith.constant 0 : i32
    %c0_i32_1 = arith.constant 0 : i32
    return %c0_i32, %c0_i32_0 : i32, i32
  }
  func.func @transform_5(%arg0: i32) -> (i32, i32) {
    %c0_i32 = arith.constant 0 : i32
    %c0_i32_0 = arith.constant 0 : i32
    %c0_i32_1 = arith.constant 0 : i32
    return %c0_i32, %c0_i32_0 : i32, i32
  }
  func.func @transform_6(%arg0: i32) -> (i32, i32, i32) {
    %c0_i32 = arith.constant 0 : i32
    %c0_i32_0 = arith.constant 0 : i32
    %c0_i32_1 = arith.constant 0 : i32
    return %arg0, %c0_i32, %c0_i32_0 : i32, i32, i32
  }
  func.func @transform_7(%arg0: i32) -> (i32, i32, i32) {
    %c0_i32 = arith.constant 0 : i32
    %c0_i32_0 = arith.constant 0 : i32
    %c0_i32_1 = arith.constant 0 : i32
    return %arg0, %c0_i32, %c0_i32_0 : i32, i32, i32
  }
  func.func @transform_8(%arg0: i32) -> (i32, i32, i32) {
    %c0_i32 = arith.constant 0 : i32
    %c0_i32_0 = arith.constant 0 : i32
    %c0_i32_1 = arith.constant 0 : i32
    return %arg0, %c0_i32, %c0_i32_0 : i32, i32, i32
  }
  func.func @transform_9(%arg0: i32) -> (i32, i32, i32) {
    %c0_i32 = arith.constant 0 : i32
    %c0_i32_0 = arith.constant 0 : i32
    %c0_i32_1 = arith.constant 0 : i32
    return %arg0, %c0_i32, %c0_i32_0 : i32, i32, i32
  }
  func.func @transform_10(%arg0: i32) -> (i32, i32, i32) {
    %c0_i32 = arith.constant 0 : i32
    %c0_i32_0 = arith.constant 0 : i32
    %c0_i32_1 = arith.constant 0 : i32
    return %arg0, %c0_i32, %c0_i32_0 : i32, i32, i32
  }
}

</mosaic_0001>

<llo_original>
// kernel: vgae_forward_batched.1
$region0: #{vgae_forward_batched.1}
  #allocation0 [shape = 'u32[]', space=smem, size = 0x4, offset = 0x4, fixed_abs, tag = 'smem constant byte address 0x4 - core index']
  #allocation1 [shape = 'u32[144,128]{1,0:T(1,128)}', space=vmem, size = 0x12000, scoped, tag = 'internal scratch']
  %s0 = inlined_call_operand.vmem [shape: bf16[4,64,64], index: 0, kind: input, shape index: {}]
  %s1 = inlined_call_operand.vmem [shape: bf16[4,64,128], index: 1, kind: input, shape index: {}]
  %s2 = inlined_call_operand.vmem [shape: bf16[128,128], index: 2, kind: input, shape index: {}]
  %s3 = inlined_call_operand.vmem [shape: bf16[128,128], index: 3, kind: input, shape index: {}]
  %s4 = inlined_call_operand.vmem [shape: bf16[128,256], index: 4, kind: input, shape index: {}]
  %s5 = inlined_call_operand.vmem [shape: f32[1,256], index: 5, kind: input, shape index: {}]
  %s6 = inlined_call_operand.vmem [shape: bf16[4,64,128], index: 6, kind: input, shape index: {}]
  %s7 = inlined_call_operand.hbm [shape: bf16[4,64,64], index: 7, kind: output, shape index: {0}]
  %s8 = inlined_call_operand.hbm [shape: f32[4,64,128], index: 8, kind: output, shape index: {1}]
  %s9 = inlined_call_operand.hbm [shape: f32[4,64,128], index: 9, kind: output, shape index: {2}]
  %s10 = inlined_call_operand.vmem [shape: f32[4,1,128], index: 10, kind: output, shape index: {3}]
  %11 = xla_tuple %s7, %s8, %s9, %s10
  %s12 = sld [smem:[#allocation0]]
  $region85: #{vgae_forward_batched.1} parent=0
    _
  %s14 = ssub.s32 1, %s12
  %s15 = scalar_select 0, %s14, %s12
  $region1: #{vgae_forward_batched.1} parent=0
    #allocation2 [shape = 'u8[65536]{0}', space=vmem, size = 0x10000, scoped, tag = 'output window, operand 0']
    #allocation3 [shape = 's32[2]{0}', space=sflag, size = 0x8, scoped, tag = 'scoped memory for vgae_forward_batched.1']
    #allocation4 [shape = 'u8[131072]{0}', space=vmem, size = 0x20000, scoped, tag = 'output window, operand 1']
    #allocation5 [shape = 's32[2]{0}', space=sflag, size = 0x8, scoped, tag = 'scoped memory for vgae_forward_batched.1']
    #allocation6 [shape = 'u8[131072]{0}', space=vmem, size = 0x20000, scoped, tag = 'output window, operand 2']
    %16 = vsyncpa [#allocation3], 0
    %s17 = scalar_lea.sflag [#allocation3], 1
    %18 = vsyncpa %s17, 0
    %19 = vsyncpa [#allocation5], 0
    %s20 = scalar_lea.sflag [#allocation5], 1
    %21 = vsyncpa %s20, 0
    loop: start=0, step=1, limit=4
    $region2: #{vgae_forward_batched.1} parent=1 // loop_pre_header
      _
    $region3: #{vgae_forward_batched.1} parent=1 // loop_header
      %s23 = sphi 0, %s27
      %p24 = scmp.ge.s32.totalorder %s23, 4
      %s33 = sphi 0, %s35
      %s36 = sphi 0, %s33
      %s37 = sphi 0, %s36
      %s53 = sphi 0, %s37
      %s59 = sphi 0, %s61
      %s62 = sphi 0, %s59
      %s63 = sphi 0, %s62
      %s79 = sphi 0, %s63
      %s83 = sphi 0, %s83
      %s85 = sphi 0, %s83
      %s86 = sphi 0, %s85
      %s100 = sphi 0, %s86
      %s104 = sphi 0, %s104
      %s106 = sphi 0, %s104
      %s107 = sphi 0, %s106
      %s121 = sphi 0, %s107
      %s125 = sphi 0, %s125
      %s127 = sphi 0, %s125
      %s128 = sphi 0, %s127
      %s142 = sphi 0, %s128
      %s146 = sphi 0, %s146
      %s148 = sphi 0, %s146
      %s149 = sphi 0, %s148
      %s163 = sphi 0, %s149
      %s169 = sphi 0, %s171
      %s172 = sphi 0, %s169
      %s173 = sphi 0, %s172
      %s189 = sphi 0, %s173
      %s195 = sphi 0, %s197
      %s198 = sphi 0, %s195
      %s199 = sphi 0, %s198
      %s215 = sphi 0, %s199
      %s221 = sphi 0, %s223
      %s224 = sphi 0, %s221
      %s225 = sphi 0, %s224
      %s241 = sphi 0, %s225
      %s247 = sphi 0, %s249
      %s250 = sphi 0, %s247
      %s251 = sphi 0, %s250
      %s267 = sphi 0, %s251
      %s273 = sphi 0, %s275
      %s276 = sphi 0, %s273
      %s277 = sphi 0, %s276
      %s293 = sphi 0, %s277
    $region4: #{vgae_forward_batched.1} parent=1 // loop_header_branch
      %26 = sbr.rel (%p24) target = $region8
    $region5: #{vgae_forward_batched.1} parent=1 // loop_body
      %s28 = ssub.s32 %s23, 1
      %s29 = ssub.s32 %s23, 2
      %s30 = sadd.s32 %s23, 1
      %s31 = ssub.s32 %s23, %s30
      %p32 = scmp.eq.s32.totalorder %s31, 0
      %s34 = sadd.s32 %s33, 1
      %s35 = scalar_select %p32, %s33, %s34
      %p38 = pneg %p32
      %p39 = scmp.eq.s32.totalorder %s23, 1
      %p40 = por %p38, %p39
      %p41 = scmp.ne.s32.totalorder %s33, %s36
      %p42 = scmp.eq.s32.totalorder %s23, 0
      %p43 = por %p41, %p42
      %p44 = scmp.ne.s32.totalorder %s33, %s36
      %p45 = scmp.eq.s32.totalorder %s28, 1
      %p46 = por %p44, %p45
      %p47 = scmp.ne.s32.totalorder %s36, %s37
      %p48 = scmp.eq.s32.totalorder %s28, 0
      %p49 = por %p47, %p48
      %p50 = scmp.ne.s32.totalorder %s36, %s37
      %p51 = scmp.eq.s32.totalorder %s29, 1
      %p52 = por %p50, %p51
      %p54 = scmp.ne.s32.totalorder %s37, %s53
      %p55 = scmp.eq.s32.totalorder %s29, 0
      %p56 = por %p54, %p55
      %s57 = ssub.s32 %s23, %s30
      %p58 = scmp.eq.s32.totalorder %s57, 0
      %s60 = sadd.s32 %s59, 1
      %s61 = scalar_select %p58, %s59, %s60
      %p64 = pneg %p58
      %p65 = scmp.eq.s32.totalorder %s23, 1
      %p66 = por %p64, %p65
      %p67 = scmp.ne.s32.totalorder %s59, %s62
      %p68 = scmp.eq.s32.totalorder %s23, 0
      %p69 = por %p67, %p68
      %p70 = scmp.ne.s32.totalorder %s59, %s62
      %p71 = scmp.eq.s32.totalorder %s28, 1
      %p72 = por %p70, %p71
      %p73 = scmp.ne.s32.totalorder %s62, %s63
      %p74 = scmp.eq.s32.totalorder %s28, 0
      %p75 = por %p73, %p74
      %p76 = scmp.ne.s32.totalorder %s62, %s63
      %p77 = scmp.eq.s32.totalorder %s29, 1
      %p78 = por %p76, %p77
      %p80 = scmp.ne.s32.totalorder %s63, %s79
      %p81 = scmp.eq.s32.totalorder %s29, 0
      %p82 = por %p80, %p81
      %s84 = sadd.s32 %s83, 1
      %p87 = scmp.eq.s32.totalorder %s23, 1
      %p88 = scmp.ne.s32.totalorder %s83, %s85
      %p89 = scmp.eq.s32.totalorder %s23, 0
      %p90 = por %p88, %p89
      %p91 = scmp.ne.s32.totalorder %s83, %s85
      %p92 = scmp.eq.s32.totalorder %s28, 1
      %p93 = por %p91, %p92
      %p94 = scmp.ne.s32.totalorder %s85, %s86
      %p95 = scmp.eq.s32.totalorder %s28, 0
      %p96 = por %p94, %p95
      %p97 = scmp.ne.s32.totalorder %s85, %s86
      %p98 = scmp.eq.s32.totalorder %s29, 1
      %p99 = por %p97, %p98
      %p101 = scmp.ne.s32.totalorder %s86, %s100
      %p102 = scmp.eq.s32.totalorder %s29, 0
      %p103 = por %p101, %p102
      %s105 = sadd.s32 %s104, 1
      %p108 = scmp.eq.s32.totalorder %s23, 1
      %p109 = scmp.ne.s32.totalorder %s104, %s106
      %p110 = scmp.eq.s32.totalorder %s23, 0
      %p111 = por %p109, %p110
      %p112 = scmp.ne.s32.totalorder %s104, %s106
      %p113 = scmp.eq.s32.totalorder %s28, 1
      %p114 = por %p112, %p113
      %p115 = scmp.ne.s32.totalorder %s106, %s107
      %p116 = scmp.eq.s32.totalorder %s28, 0
      %p117 = por %p115, %p116
      %p118 = scmp.ne.s32.totalorder %s106, %s107
      %p119 = scmp.eq.s32.totalorder %s29, 1
      %p120 = por %p118, %p119
      %p122 = scmp.ne.s32.totalorder %s107, %s121
      %p123 = scmp.eq.s32.totalorder %s29, 0
      %p124 = por %p122, %p123
      %s126 = sadd.s32 %s125, 1
      %p129 = scmp.eq.s32.totalorder %s23, 1
      %p130 = scmp.ne.s32.totalorder %s125, %s127
      %p131 = scmp.eq.s32.totalorder %s23, 0
      %p132 = por %p130, %p131
      %p133 = scmp.ne.s32.totalorder %s125, %s127
      %p134 = scmp.eq.s32.totalorder %s28, 1
      %p135 = por %p133, %p134
      %p136 = scmp.ne.s32.totalorder %s127, %s128
      %p137 = scmp.eq.s32.totalorder %s28, 0
      %p138 = por %p136, %p137
      %p139 = scmp.ne.s32.totalorder %s127, %s128
      %p140 = scmp.eq.s32.totalorder %s29, 1
      %p141 = por %p139, %p140
      %p143 = scmp.ne.s32.totalorder %s128, %s142
      %p144 = scmp.eq.s32.totalorder %s29, 0
      %p145 = por %p143, %p144
      %s147 = sadd.s32 %s146, 1
      %p150 = scmp.eq.s32.totalorder %s23, 1
      %p151 = scmp.ne.s32.totalorder %s146, %s148
      %p152 = scmp.eq.s32.totalorder %s23, 0
      %p153 = por %p151, %p152
      %p154 = scmp.ne.s32.totalorder %s146, %s148
      %p155 = scmp.eq.s32.totalorder %s28, 1
      %p156 = por %p154, %p155
      %p157 = scmp.ne.s32.totalorder %s148, %s149
      %p158 = scmp.eq.s32.totalorder %s28, 0
      %p159 = por %p157, %p158
      %p160 = scmp.ne.s32.totalorder %s148, %s149
      %p161 = scmp.eq.s32.totalorder %s29, 1
      %p162 = por %p160, %p161
      %p164 = scmp.ne.s32.totalorder %s149, %s163
      %p165 = scmp.eq.s32.totalorder %s29, 0
      %p166 = por %p164, %p165
      %s167 = ssub.s32 %s23, %s30
      %p168 = scmp.eq.s32.totalorder %s167, 0
      %s170 = sadd.s32 %s169, 1
      %s171 = scalar_select %p168, %s169, %s170
      %p174 = pneg %p168
      %p175 = scmp.eq.s32.totalorder %s23, 1
      %p176 = por %p174, %p175
      %p177 = scmp.ne.s32.totalorder %s169, %s172
      %p178 = scmp.eq.s32.totalorder %s23, 0
      %p179 = por %p177, %p178
      %p180 = scmp.ne.s32.totalorder %s169, %s172
      %p181 = scmp.eq.s32.totalorder %s28, 1
      %p182 = por %p180, %p181
      %p183 = scmp.ne.s32.totalorder %s172, %s173
      %p184 = scmp.eq.s32.totalorder %s28, 0
      %p185 = por %p183, %p184
      %p186 = scmp.ne.s32.totalorder %s172, %s173
      %p187 = scmp.eq.s32.totalorder %s29, 1
      %p188 = por %p186, %p187
      %p190 = scmp.ne.s32.totalorder %s173, %s189
      %p191 = scmp.eq.s32.totalorder %s29, 0
      %p192 = por %p190, %p191
      %s193 = ssub.s32 %s23, %s30
      %p194 = scmp.eq.s32.totalorder %s193, 0
      %s196 = sadd.s32 %s195, 1
      %s197 = scalar_select %p194, %s195, %s196
      %p200 = pneg %p194
      %p201 = scmp.eq.s32.totalorder %s23, 1
      %p202 = por %p200, %p201
      %p203 = scmp.ne.s32.totalorder %s195, %s198
      %p204 = scmp.eq.s32.totalorder %s23, 0
      %p205 = por %p203, %p204
      %p206 = scmp.ne.s32.totalorder %s195, %s198
      %p207 = scmp.eq.s32.totalorder %s28, 1
      %p208 = por %p206, %p207
      %p209 = scmp.ne.s32.totalorder %s198, %s199
      %p210 = scmp.eq.s32.totalorder %s28, 0
      %p211 = por %p209, %p210
      %p212 = scmp.ne.s32.totalorder %s198, %s199
      %p213 = scmp.eq.s32.totalorder %s29, 1
      %p214 = por %p212, %p213
      %p216 = scmp.ne.s32.totalorder %s199, %s215
      %p217 = scmp.eq.s32.totalorder %s29, 0
      %p218 = por %p216, %p217
      %s219 = ssub.s32 %s23, %s30
      %p220 = scmp.eq.s32.totalorder %s219, 0
      %s222 = sadd.s32 %s221, 1
      %s223 = scalar_select %p220, %s221, %s222
      %p226 = pneg %p220
      %p227 = scmp.eq.s32.totalorder %s23, 1
      %p228 = por %p226, %p227
      %p229 = scmp.ne.s32.totalorder %s221, %s224
      %p230 = scmp.eq.s32.totalorder %s23, 0
      %p231 = por %p229, %p230
      %p232 = scmp.ne.s32.totalorder %s221, %s224
      %p233 = scmp.eq.s32.totalorder %s28, 1
      %p234 = por %p232, %p233
      %p235 = scmp.ne.s32.totalorder %s224, %s225
      %p236 = scmp.eq.s32.totalorder %s28, 0
      %p237 = por %p235, %p236
      %p238 = scmp.ne.s32.totalorder %s224, %s225
      %p239 = scmp.eq.s32.totalorder %s29, 1
      %p240 = por %p238, %p239
      %p242 = scmp.ne.s32.totalorder %s225, %s241
      %p243 = scmp.eq.s32.totalorder %s29, 0
      %p244 = por %p242, %p243
      %s245 = ssub.s32 %s23, %s30
      %p246 = scmp.eq.s32.totalorder %s245, 0
      %s248 = sadd.s32 %s247, 1
      %s249 = scalar_select %p246, %s247, %s248
      %p252 = pneg %p246
      %p253 = scmp.eq.s32.totalorder %s23, 1
      %p254 = por %p252, %p253
      %p255 = scmp.ne.s32.totalorder %s247, %s250
      %p256 = scmp.eq.s32.totalorder %s23, 0
      %p257 = por %p255, %p256
      %p258 = scmp.ne.s32.totalorder %s247, %s250
      %p259 = scmp.eq.s32.totalorder %s28, 1
      %p260 = por %p258, %p259
      %p261 = scmp.ne.s32.totalorder %s250, %s251
      %p262 = scmp.eq.s32.totalorder %s28, 0
      %p263 = por %p261, %p262
      %p264 = scmp.ne.s32.totalorder %s250, %s251
      %p265 = scmp.eq.s32.totalorder %s29, 1
      %p266 = por %p264, %p265
      %p268 = scmp.ne.s32.totalorder %s251, %s267
      %p269 = scmp.eq.s32.totalorder %s29, 0
      %p270 = por %p268, %p269
      %s271 = ssub.s32 %s23, %s30
      %p272 = scmp.eq.s32.totalorder %s271, 0
      %s274 = sadd.s32 %s273, 1
      %s275 = scalar_select %p272, %s273, %s274
      %p278 = pneg %p272
      %p279 = scmp.eq.s32.totalorder %s23, 1
      %p280 = por %p278, %p279
      %p281 = scmp.ne.s32.totalorder %s273, %s276
      %p282 = scmp.eq.s32.totalorder %s23, 0
      %p283 = por %p281, %p282
      %p284 = scmp.ne.s32.totalorder %s273, %s276
      %p285 = scmp.eq.s32.totalorder %s28, 1
      %p286 = por %p284, %p285
      %p287 = scmp.ne.s32.totalorder %s276, %s277
      %p288 = scmp.eq.s32.totalorder %s28, 0
      %p289 = por %p287, %p288
      %p290 = scmp.ne.s32.totalorder %s276, %s277
      %p291 = scmp.eq.s32.totalorder %s29, 1
      %p292 = por %p290, %p291
      %p294 = scmp.ne.s32.totalorder %s277, %s293
      %p295 = scmp.eq.s32.totalorder %s29, 0
      %p296 = por %p294, %p295
      %p297 = scmp.le.s32.totalorder 1, %s23
      %p298 = scmp.lt.s32.totalorder %s23, 3
      %p299 = pnand %p297, %p298
      %p300 = pneg %p299
      // Predicated region
      $region9: #{vgae_forward_batched.1} parent=5 // pred_check
        _
      $region10: #{vgae_forward_batched.1} parent=5 // pred_check_branch
        %302 = sbr.rel (%p299) target = $region12
      $region11: #{vgae_forward_batched.1} parent=5 // pred_region
        %s303 = ssub.s32 %s23, 1
        // Predicated region
        $region13: #{vgae_forward_batched.1} parent=11 // pred_check
          %p304 = pneg %p96
        $region14: #{vgae_forward_batched.1} parent=11 // pred_check_branch
          %306 = sbr.rel (%p304) target = $region16
        $region15: #{vgae_forward_batched.1} parent=11 // pred_region
          _
        $region16: #{vgae_forward_batched.1} parent=11 // pred_fallthru
          _
        // Predicated region
        $region17: #{vgae_forward_batched.1} parent=11 // pred_check
          %p307 = pneg %p117
        $region18: #{vgae_forward_batched.1} parent=11 // pred_check_branch
          %309 = sbr.rel (%p307) target = $region20
        $region19: #{vgae_forward_batched.1} parent=11 // pred_region
          _
        $region20: #{vgae_forward_batched.1} parent=11 // pred_fallthru
          _
        // Predicated region
        $region21: #{vgae_forward_batched.1} parent=11 // pred_check
          %p310 = pneg %p138
        $region22: #{vgae_forward_batched.1} parent=11 // pred_check_branch
          %312 = sbr.rel (%p310) target = $region24
        $region23: #{vgae_forward_batched.1} parent=11 // pred_region
          _
        $region24: #{vgae_forward_batched.1} parent=11 // pred_fallthru
          _
        // Predicated region
        $region25: #{vgae_forward_batched.1} parent=11 // pred_check
          %p313 = pneg %p159
        $region26: #{vgae_forward_batched.1} parent=11 // pred_check_branch
          %315 = sbr.rel (%p313) target = $region28
        $region27: #{vgae_forward_batched.1} parent=11 // pred_region
          _
        $region28: #{vgae_forward_batched.1} parent=11 // pred_fallthru
          _
      $region12: #{vgae_forward_batched.1} parent=5 // pred_fallthru
        _
      %p316 = scmp.lt.s32.totalorder %s23, 2
      // Predicated region
      $region29: #{vgae_forward_batched.1} parent=5 // pred_check
        %p317 = pneg %p316
      $region30: #{vgae_forward_batched.1} parent=5 // pred_check_branch
        %319 = sbr.rel (%p317) target = $region32
      $region31: #{vgae_forward_batched.1} parent=5 // pred_region
        // Predicated region
        $region33: #{vgae_forward_batched.1} parent=31 // pred_check
          %p320 = pneg %p43
        $region34: #{vgae_forward_batched.1} parent=31 // pred_check_branch
          %322 = sbr.rel (%p320) target = $region36
        $region35: #{vgae_forward_batched.1} parent=31 // pred_region
          %s323 = smul.u32 2, %s23
          %p324 = scmp.lt.s32.totalorder %s323, 3
          %s325 = scalar_select %p324, %s323, 3
          %s326 = smul.addr %s325, 8
          %s327 = smul.addr %s326, 4
          %s328 = scalar_lea.vmem %s0, %s327
          %s329 = smul.u32 2, %s23
        $region36: #{vgae_forward_batched.1} parent=31 // pred_fallthru
          _
        // Predicated region
        $region37: #{vgae_forward_batched.1} parent=31 // pred_check
          %p330 = pneg %p69
        $region38: #{vgae_forward_batched.1} parent=31 // pred_check_branch
          %332 = sbr.rel (%p330) target = $region40
        $region39: #{vgae_forward_batched.1} parent=31 // pred_region
          %s333 = smul.u32 2, %s23
          %p334 = scmp.lt.s32.totalorder %s333, 3
          %s335 = scalar_select %p334, %s333, 3
          %s336 = smul.addr %s335, 8
          %s337 = smul.addr %s336, 4
          %s338 = scalar_lea.vmem %s1, %s337
          %s339 = smul.u32 2, %s23
        $region40: #{vgae_forward_batched.1} parent=31 // pred_fallthru
          _
        // Predicated region
        $region41: #{vgae_forward_batched.1} parent=31 // pred_check
          %p340 = pneg %p179
        $region42: #{vgae_forward_batched.1} parent=31 // pred_check_branch
          %342 = sbr.rel (%p340) target = $region44
        $region43: #{vgae_forward_batched.1} parent=31 // pred_region
          %s343 = smul.u32 2, %s23
          %p344 = scmp.lt.s32.totalorder %s343, 3
          %s345 = scalar_select %p344, %s343, 3
          %s346 = smul.addr %s345, 8
          %s347 = smul.addr %s346, 4
          %s348 = scalar_lea.vmem %s6, %s347
          %s349 = smul.u32 2, %s23
        $region44: #{vgae_forward_batched.1} parent=31 // pred_fallthru
          _
      $region32: #{vgae_forward_batched.1} parent=5 // pred_fallthru
        _
      %p350 = scmp.le.s32.totalorder 1, %s23
      %p351 = scmp.lt.s32.totalorder %s23, 3
      %p352 = pnand %p350, %p351
      %p353 = pneg %p352
      // Predicated region
      $region45: #{vgae_forward_batched.1} parent=5 // pred_check
        _
      $region46: #{vgae_forward_batched.1} parent=5 // pred_check_branch
        %355 = sbr.rel (%p352) target = $region48
      $region47: #{vgae_forward_batched.1} parent=5 // pred_region
        %s356 = ssub.s32 %s23, 1
        %s357 = smul.u32 2, %s28
        %p358 = scmp.lt.s32.totalorder %s357, 3
        %s359 = scalar_select %p358, %s357, 3
        %s360 = smul.addr %s359, 8
        %s361 = smul.addr %s360, 4
        %s362 = scalar_lea.vmem %s0, %s361
        %p363 = pneg %p49
        %p364 = pneg %p46
        %s365 = smul.u32 2, %s28
        %p366 = scmp.lt.s32.totalorder %s365, 3
        %s367 = scalar_select %p366, %s365, 3
        %s368 = smul.addr %s367, 8
        %s369 = smul.addr %s368, 4
        %s370 = scalar_lea.vmem %s1, %s369
        %p371 = pneg %p75
        %p372 = pneg %p72
        %p373 = pneg %p96
        %p374 = pneg %p93
        %p375 = pneg %p117
        %p376 = pneg %p114
        %p377 = pneg %p138
        %p378 = pneg %p135
        %p379 = pneg %p159
        %p380 = pneg %p156
        %s381 = smul.u32 2, %s28
        %p382 = scmp.lt.s32.totalorder %s381, 3
        %s383 = scalar_select %p382, %s381, 3
        %s384 = smul.addr %s383, 8
        %s385 = smul.addr %s384, 4
        %s386 = scalar_lea.vmem %s6, %s385
        %p387 = pneg %p185
        %p388 = pneg %p182
        %p389 = pneg %p211
        %p390 = pneg %p208
        %s391 = sand.u32 %s198, 1
        %s392 = scalar_lea.sflag [#allocation3], %s391
        %s393 = sand.u32 %s198, 1
        %s394 = smul.addr %s393, 64
        %s395 = scalar_lea.vmem [#allocation2], %s394
        %p396 = pneg %p237
        %p397 = pneg %p234
        %s398 = sand.u32 %s28, 1
        %s399 = scalar_lea.sflag [#allocation5], %s398
        %s400 = sand.u32 %s224, 1
        %s401 = smul.addr %s400, 128
        %s402 = scalar_lea.vmem [#allocation4], %s401
        %p403 = pneg %p263
        %p404 = pneg %p260
        %s405 = sand.u32 %s28, 1
        %s406 = scalar_lea.sflag [#allocation5], %s405
        %s407 = sand.u32 %s250, 1
        %s408 = smul.addr %s407, 128
        %s409 = scalar_lea.vmem [#allocation6], %s408
        %p410 = pneg %p289
        %p411 = pneg %p286
        %s412 = smul.u32 2, %s28
        %p413 = scmp.lt.s32.totalorder %s412, 3
        %s414 = scalar_select %p413, %s412, 3
        %s415 = scalar_lea.vmem %s10, %s414
        %s416 = smul.u32 2, %s28
        %p417 = scmp.lt.s32.totalorder %s416, 3
        %s418 = scalar_select %p417, %s416, 3
        %s419 = smul.addr %s418, 8
        %s420 = smul.addr %s419, 4
        %s421 = scalar_lea.vmem %s0, %s420
        %s422 = smul.u32 2, %s28
        %s423 = smul.u32 2, %s28
        %p424 = scmp.lt.s32.totalorder %s423, 3
        %s425 = scalar_select %p424, %s423, 3
        %s426 = smul.addr %s425, 8
        %s427 = smul.addr %s426, 4
        %s428 = scalar_lea.vmem %s1, %s427
        %s429 = smul.u32 2, %s28
        %s430 = smul.u32 2, %s28
        %p431 = scmp.lt.s32.totalorder %s430, 3
        %s432 = scalar_select %p431, %s430, 3
        %s433 = smul.addr %s432, 8
        %s434 = smul.addr %s433, 4
        %s435 = scalar_lea.vmem %s6, %s434
        %s436 = smul.u32 2, %s28
        %s437 = smul.u32 2, %s28
        %s438 = smul.u32 2, %s28
        %s439 = smul.u32 2, %s28
        %s440 = smul.u32 2, %s28
        %p441 = scmp.lt.s32.totalorder %s440, 3
        %s442 = scalar_select %p441, %s440, 3
        %s443 = scalar_lea.vmem %s10, %s442
        %s444 = smul.u32 2, %s28
        %v446 = vld [vmem:[%s421] sm:$0xf]
        %v447 = vld [vmem:[%s421 + $0x4] sm:$0xf]
        %v448 = vld [vmem:[%s421 + $0x8] sm:$0xf]
        %v449 = vld [vmem:[%s421 + $0xc] sm:$0xf]
        %v450 = vld [vmem:[%s421 + $0x10] sm:$0xf]
        %v451 = vld [vmem:[%s421 + $0x14] sm:$0xf]
        %v452 = vld [vmem:[%s421 + $0x18] sm:$0xf]
        %v453 = vld [vmem:[%s421 + $0x1c] sm:$0xf]
        %v454 = vld [vmem:[%s421 + $0x20] sm:$0xf]
        %v455 = vld [vmem:[%s421 + $0x24] sm:$0xf]
        %v456 = vld [vmem:[%s421 + $0x28] sm:$0xf]
        %v457 = vld [vmem:[%s421 + $0x2c] sm:$0xf]
        %v458 = vld [vmem:[%s421 + $0x30] sm:$0xf]
        %v459 = vld [vmem:[%s421 + $0x34] sm:$0xf]
        %v460 = vld [vmem:[%s421 + $0x38] sm:$0xf]
        %v461 = vld [vmem:[%s421 + $0x3c] sm:$0xf]
        %v462 = vld [vmem:[%s428] sm:$0xf]
        %v463 = vld [vmem:[%s428 + $0x4] sm:$0xf]
        %v464 = vld [vmem:[%s428 + $0x8] sm:$0xf]
        %v465 = vld [vmem:[%s428 + $0xc] sm:$0xf]
        %v466 = vld [vmem:[%s428 + $0x10] sm:$0xf]
        %v467 = vld [vmem:[%s428 + $0x14] sm:$0xf]
        %v468 = vld [vmem:[%s428 + $0x18] sm:$0xf]
        %v469 = vld [vmem:[%s428 + $0x1c] sm:$0xf]
        %v470 = vld [vmem:[%s428 + $0x20] sm:$0xf]
        %v471 = vld [vmem:[%s428 + $0x24] sm:$0xf]
        %v472 = vld [vmem:[%s428 + $0x28] sm:$0xf]
        %v473 = vld [vmem:[%s428 + $0x2c] sm:$0xf]
        %v474 = vld [vmem:[%s428 + $0x30] sm:$0xf]
        %v475 = vld [vmem:[%s428 + $0x34] sm:$0xf]
        %v476 = vld [vmem:[%s428 + $0x38] sm:$0xf]
        %v477 = vld [vmem:[%s428 + $0x3c] sm:$0xf]
        %v486 = vunpack.c.l.b16 %v446
        %v487 = vunpack.c.l.b16 %v447
        %v488 = vunpack.c.l.b16 %v448
        %v489 = vunpack.c.l.b16 %v449
        %v490 = vunpack.c.l.b16 %v450
        %v491 = vunpack.c.l.b16 %v451
        %v492 = vunpack.c.l.b16 %v452
        %v493 = vunpack.c.l.b16 %v453
        %v494 = vpack.c.b16 %v487, %v486
        %v495 = vpack.c.b16 %v489, %v488
        %v496 = vpack.c.b16 %v491, %v490
        %v497 = vpack.c.b16 %v493, %v492
        %v506 = vunpack.c.l.b16 %v462
        %v507 = vunpack.c.l.b16 %v463
        %v508 = vunpack.c.l.b16 %v464
        %v509 = vunpack.c.l.b16 %v465
        %v510 = vunpack.c.l.b16 %v466
        %v511 = vunpack.c.l.b16 %v467
        %v512 = vunpack.c.l.b16 %v468
        %v513 = vunpack.c.l.b16 %v469
        %v514 = vpack.c.b16 %v507, %v506
        %v515 = vpack.c.b16 %v509, %v508
        %v516 = vpack.c.b16 %v511, %v510
        %v517 = vpack.c.b16 %v513, %v512
        %vm522 = vcmask 523264
        %v524 = vsel %vm522, %v494, 0
        %v527 = vsel %vm522, %v495, 0
        %v530 = vsel %vm522, %v496, 0
        %v533 = vsel %vm522, %v497, 0
        %535 = vmatprep.subr.bf16.mxu0 0
        %536 = vmatpush1.bf16.msra.mxu0 0
        %537 = vmatprep.subr.bf16.mxu0 0
        %538 = vmatpush1.bf16.msra.mxu0 0
        %539 = vmatprep.subr.bf16.mxu0 0
        %540 = vmatpush1.bf16.msra.mxu0 0
        %541 = vmatprep.subr.bf16.mxu0 0
        %542 = vmatpush1.bf16.msra.mxu0 0
        %543 = vmatprep.subr.bf16.mxu0 0
        %544 = vmatpush1.bf16.msra.mxu0 %v517
        %545 = vmatprep.subr.bf16.mxu0 0
        %546 = vmatpush1.bf16.msra.mxu0 %v516
        %547 = vmatprep.subr.bf16.mxu0 0
        %548 = vmatpush1.bf16.msra.mxu0 %v515
        %549 = vmatprep.subr.bf16.mxu0 0
        %550 = vmatpush1.bf16.msra.mxu0 %v514
        %551 = vmatprep.subr.bf16.mxu0 0
        %552 = vmatpush2.bf16.msra.mxu0 0
        %553 = vmatprep.subr.bf16.mxu0 0
        %554 = vmatpush2.bf16.msra.mxu0 0
        %555 = vmatprep.subr.bf16.mxu0 0
        %556 = vmatpush2.bf16.msra.mxu0 0
        %557 = vmatprep.subr.bf16.mxu0 0
        %558 = vmatpush2.bf16.msra.mxu0 0
        %559 = vmatprep.subr.bf16.mxu0 0
        %560 = vmatpush2.bf16.msra.mxu0 0
        %561 = vmatprep.subr.bf16.mxu0 0
        %562 = vmatpush2.bf16.msra.mxu0 0
        %563 = vmatprep.subr.bf16.mxu0 0
        %564 = vmatpush2.bf16.msra.mxu0 0
        %565 = vmatprep.subr.bf16.mxu0 0
        %566 = vmatpush2.bf16.msra.mxu0 0
        %567 = vmatprep.mubr.bf16.mxu0 0
        %568 = vmatmul.mubr.bf16.gmra.mxu0 %v524
        %v569 = vpop.f32.mrf.mxu0
        %v570 = vadd.f32 0.0, %v569
        %v571 = vpop.f32.mrf.mxu0
        %v572 = vpop.f32.mrf.mxu0
        %v573 = vadd.f32 0.0, %v572
        %v574 = vpop.f32.mrf.mxu0
        %575 = vmatprep.mubr.bf16.mxu0 0
        %576 = vmatmul.mubr.bf16.gmra.mxu0 %v527
        %v577 = vpop.f32.mrf.mxu0
        %v578 = vadd.f32 0.0, %v577
        %v579 = vpop.f32.mrf.mxu0
        %v580 = vpop.f32.mrf.mxu0
        %v581 = vadd.f32 0.0, %v580
        %v582 = vpop.f32.mrf.mxu0
        %583 = vmatprep.mubr.bf16.mxu0 0
        %584 = vmatmul.mubr.bf16.gmra.mxu0 %v530
        %v585 = vpop.f32.mrf.mxu0
        %v586 = vadd.f32 0.0, %v585
        %v587 = vpop.f32.mrf.mxu0
        %v588 = vpop.f32.mrf.mxu0
        %v589 = vadd.f32 0.0, %v588
        %v590 = vpop.f32.mrf.mxu0
        %591 = vmatprep.mubr.bf16.mxu0 0
        %592 = vmatmul.mubr.bf16.gmra.mxu0 %v533
        %v593 = vpop.f32.mrf.mxu0
        %v594 = vadd.f32 0.0, %v593
        %v595 = vpop.f32.mrf.mxu0
        %v596 = vpop.f32.mrf.mxu0
        %v597 = vadd.f32 0.0, %v596
        %v598 = vpop.f32.mrf.mxu0
        %599 = vdwg.mxu0
        %v608 = vunpack.c.l.b16 %v454
        %v609 = vunpack.c.l.b16 %v455
        %v610 = vunpack.c.l.b16 %v456
        %v611 = vunpack.c.l.b16 %v457
        %v612 = vunpack.c.l.b16 %v458
        %v613 = vunpack.c.l.b16 %v459
        %v614 = vunpack.c.l.b16 %v460
        %v615 = vunpack.c.l.b16 %v461
        %v616 = vpack.c.b16 %v609, %v608
        %v617 = vpack.c.b16 %v611, %v610
        %v618 = vpack.c.b16 %v613, %v612
        %v619 = vpack.c.b16 %v615, %v614
        %v628 = vunpack.c.l.b16 %v470
        %v629 = vunpack.c.l.b16 %v471
        %v630 = vunpack.c.l.b16 %v472
        %v631 = vunpack.c.l.b16 %v473
        %v632 = vunpack.c.l.b16 %v474
        %v633 = vunpack.c.l.b16 %v475
        %v634 = vunpack.c.l.b16 %v476
        %v635 = vunpack.c.l.b16 %v477
        %v636 = vpack.c.b16 %v629, %v628
        %v637 = vpack.c.b16 %v631, %v630
        %v638 = vpack.c.b16 %v633, %v632
        %v639 = vpack.c.b16 %v635, %v634
        %v645 = vsel %vm522, %v616, 0
        %v648 = vsel %vm522, %v617, 0
        %v651 = vsel %vm522, %v618, 0
        %v654 = vsel %vm522, %v619, 0
        %656 = vmatprep.subr.bf16.mxu0 0
        %657 = vmatpush1.bf16.msra.mxu0 0
        %658 = vmatprep.subr.bf16.mxu0 0
        %659 = vmatpush1.bf16.msra.mxu0 0
        %660 = vmatprep.subr.bf16.mxu0 0
        %661 = vmatpush1.bf16.msra.mxu0 0
        %662 = vmatprep.subr.bf16.mxu0 0
        %663 = vmatpush1.bf16.msra.mxu0 0
        %664 = vmatprep.subr.bf16.mxu0 0
        %665 = vmatpush1.bf16.msra.mxu0 %v639
        %666 = vmatprep.subr.bf16.mxu0 0
        %667 = vmatpush1.bf16.msra.mxu0 %v638
        %668 = vmatprep.subr.bf16.mxu0 0
        %669 = vmatpush1.bf16.msra.mxu0 %v637
        %670 = vmatprep.subr.bf16.mxu0 0
        %671 = vmatpush1.bf16.msra.mxu0 %v636
        %672 = vmatprep.subr.bf16.mxu0 0
        %673 = vmatpush2.bf16.msra.mxu0 0
        %674 = vmatprep.subr.bf16.mxu0 0
        %675 = vmatpush2.bf16.msra.mxu0 0
        %676 = vmatprep.subr.bf16.mxu0 0
        %677 = vmatpush2.bf16.msra.mxu0 0
        %678 = vmatprep.subr.bf16.mxu0 0
        %679 = vmatpush2.bf16.msra.mxu0 0
        %680 = vmatprep.subr.bf16.mxu0 0
        %681 = vmatpush2.bf16.msra.mxu0 0
        %682 = vmatprep.subr.bf16.mxu0 0
        %683 = vmatpush2.bf16.msra.mxu0 0
        %684 = vmatprep.subr.bf16.mxu0 0
        %685 = vmatpush2.bf16.msra.mxu0 0
        %686 = vmatprep.subr.bf16.mxu0 0
        %687 = vmatpush2.bf16.msra.mxu0 0
        %688 = vmatprep.mubr.bf16.mxu0 0
        %689 = vmatmul.mubr.bf16.gmra.mxu0 %v645
        %v690 = vpop.f32.mrf.mxu0
        %v691 = vadd.f32 0.0, %v690
        %v692 = vpop.f32.mrf.mxu0
        %v693 = vpop.f32.mrf.mxu0
        %v694 = vadd.f32 0.0, %v693
        %v695 = vpop.f32.mrf.mxu0
        %696 = vmatprep.mubr.bf16.mxu0 0
        %697 = vmatmul.mubr.bf16.gmra.mxu0 %v648
        %v698 = vpop.f32.mrf.mxu0
        %v699 = vadd.f32 0.0, %v698
        %v700 = vpop.f32.mrf.mxu0
        %v701 = vpop.f32.mrf.mxu0
        %v702 = vadd.f32 0.0, %v701
        %v703 = vpop.f32.mrf.mxu0
        %704 = vmatprep.mubr.bf16.mxu0 0
        %705 = vmatmul.mubr.bf16.gmra.mxu0 %v651
        %v706 = vpop.f32.mrf.mxu0
        %v707 = vadd.f32 0.0, %v706
        %v708 = vpop.f32.mrf.mxu0
        %v709 = vpop.f32.mrf.mxu0
        %v710 = vadd.f32 0.0, %v709
        %v711 = vpop.f32.mrf.mxu0
        %712 = vmatprep.mubr.bf16.mxu0 0
        %713 = vmatmul.mubr.bf16.gmra.mxu0 %v654
        %v714 = vpop.f32.mrf.mxu0
        %v715 = vadd.f32 0.0, %v714
        %v716 = vpop.f32.mrf.mxu0
        %v717 = vpop.f32.mrf.mxu0
        %v718 = vadd.f32 0.0, %v717
        %v719 = vpop.f32.mrf.mxu0
        %720 = vdwg.mxu0
        %v721 = vpack.c.bf16 %v573, %v570
        %v722 = vpack.c.bf16 %v581, %v578
        %v723 = vpack.c.bf16 %v589, %v586
        %v724 = vpack.c.bf16 %v597, %v594
        %v725 = vpack.c.bf16 %v694, %v691
        %v726 = vpack.c.bf16 %v702, %v699
        %v727 = vpack.c.bf16 %v710, %v707
        %v728 = vpack.c.bf16 %v718, %v715
        %v729 = vld [vmem:[%s2] sm:$0xf]
        %v730 = vld [vmem:[%s2 + $0x4] sm:$0xf]
        %v731 = vld [vmem:[%s2 + $0x8] sm:$0xf]
        %v732 = vld [vmem:[%s2 + $0xc] sm:$0xf]
        %v733 = vld [vmem:[%s2 + $0x10] sm:$0xf]
        %v734 = vld [vmem:[%s2 + $0x14] sm:$0xf]
        %v735 = vld [vmem:[%s2 + $0x18] sm:$0xf]
        %v736 = vld [vmem:[%s2 + $0x1c] sm:$0xf]
        %v737 = vld [vmem:[%s2 + $0x20] sm:$0xf]
        %v738 = vld [vmem:[%s2 + $0x24] sm:$0xf]
        %v739 = vld [vmem:[%s2 + $0x28] sm:$0xf]
        %v740 = vld [vmem:[%s2 + $0x2c] sm:$0xf]
        %v741 = vld [vmem:[%s2 + $0x30] sm:$0xf]
        %v742 = vld [vmem:[%s2 + $0x34] sm:$0xf]
        %v743 = vld [vmem:[%s2 + $0x38] sm:$0xf]
        %v744 = vld [vmem:[%s2 + $0x3c] sm:$0xf]
        %v761 = vunpack.c.l.b16 %v729
        %v762 = vunpack.c.l.b16 %v730
        %v763 = vunpack.c.l.b16 %v731
        %v764 = vunpack.c.l.b16 %v732
        %v765 = vunpack.c.l.b16 %v733
        %v766 = vunpack.c.l.b16 %v734
        %v767 = vunpack.c.l.b16 %v735
        %v768 = vunpack.c.l.b16 %v736
        %v769 = vunpack.c.l.b16 %v737
        %v770 = vunpack.c.l.b16 %v738
        %v771 = vunpack.c.l.b16 %v739
        %v772 = vunpack.c.l.b16 %v740
        %v773 = vunpack.c.l.b16 %v741
        %v774 = vunpack.c.l.b16 %v742
        %v775 = vunpack.c.l.b16 %v743
        %v776 = vunpack.c.l.b16 %v744
        %v777 = vpack.c.b16 %v762, %v761
        %v778 = vpack.c.b16 %v764, %v763
        %v779 = vpack.c.b16 %v766, %v765
        %v780 = vpack.c.b16 %v768, %v767
        %v781 = vpack.c.b16 %v770, %v769
        %v782 = vpack.c.b16 %v772, %v771
        %v783 = vpack.c.b16 %v774, %v773
        %v784 = vpack.c.b16 %v776, %v775
        %793 = vmatprep.subr.bf16.mxu0 0
        %794 = vmatpush1.bf16.msra.mxu0 %v784
        %795 = vmatprep.subr.bf16.mxu0 0
        %796 = vmatpush1.bf16.msra.mxu0 %v783
        %797 = vmatprep.subr.bf16.mxu0 0
        %798 = vmatpush1.bf16.msra.mxu0 %v782
        %799 = vmatprep.subr.bf16.mxu0 0
        %800 = vmatpush1.bf16.msra.mxu0 %v781
        %801 = vmatprep.subr.bf16.mxu0 0
        %802 = vmatpush1.bf16.msra.mxu0 %v780
        %803 = vmatprep.subr.bf16.mxu0 0
        %804 = vmatpush1.bf16.msra.mxu0 %v779
        %805 = vmatprep.subr.bf16.mxu0 0
        %806 = vmatpush1.bf16.msra.mxu0 %v778
        %807 = vmatprep.subr.bf16.mxu0 0
        %808 = vmatpush1.bf16.msra.mxu0 %v777
        %809 = vmatprep.subr.bf16.mxu0 0
        %810 = vmatpush2.bf16.msra.mxu0 0
        %811 = vmatprep.subr.bf16.mxu0 0
        %812 = vmatpush2.bf16.msra.mxu0 0
        %813 = vmatprep.subr.bf16.mxu0 0
        %814 = vmatpush2.bf16.msra.mxu0 0
        %815 = vmatprep.subr.bf16.mxu0 0
        %816 = vmatpush2.bf16.msra.mxu0 0
        %817 = vmatprep.subr.bf16.mxu0 0
        %818 = vmatpush2.bf16.msra.mxu0 0
        %819 = vmatprep.subr.bf16.mxu0 0
        %820 = vmatpush2.bf16.msra.mxu0 0
        %821 = vmatprep.subr.bf16.mxu0 0
        %822 = vmatpush2.bf16.msra.mxu0 0
        %823 = vmatprep.subr.bf16.mxu0 0
        %824 = vmatpush2.bf16.msra.mxu0 0
        %825 = vmatprep.mubr.bf16.mxu0 0
        %826 = vmatmul.mubr.bf16.gmra.mxu0 %v721
        %v827 = vpop.f32.mrf.mxu0
        %v828 = vadd.f32 0.0, %v827
        %v829 = vpop.f32.mrf.mxu0
        %v830 = vpop.f32.mrf.mxu0
        %v831 = vadd.f32 0.0, %v830
        %v832 = vpop.f32.mrf.mxu0
        %833 = vmatprep.mubr.bf16.mxu0 0
        %834 = vmatmul.mubr.bf16.gmra.mxu0 %v722
        %v835 = vpop.f32.mrf.mxu0
        %v836 = vadd.f32 0.0, %v835
        %v837 = vpop.f32.mrf.mxu0
        %v838 = vpop.f32.mrf.mxu0
        %v839 = vadd.f32 0.0, %v838
        %v840 = vpop.f32.mrf.mxu0
        %841 = vmatprep.mubr.bf16.mxu0 0
        %842 = vmatmul.mubr.bf16.gmra.mxu0 %v723
        %v843 = vpop.f32.mrf.mxu0
        %v844 = vadd.f32 0.0, %v843
        %v845 = vpop.f32.mrf.mxu0
        %v846 = vpop.f32.mrf.mxu0
        %v847 = vadd.f32 0.0, %v846
        %v848 = vpop.f32.mrf.mxu0
        %849 = vmatprep.mubr.bf16.mxu0 0
        %850 = vmatmul.mubr.bf16.gmra.mxu0 %v724
        %v851 = vpop.f32.mrf.mxu0
        %v852 = vadd.f32 0.0, %v851
        %v853 = vpop.f32.mrf.mxu0
        %v854 = vpop.f32.mrf.mxu0
        %v855 = vadd.f32 0.0, %v854
        %v856 = vpop.f32.mrf.mxu0
        %857 = vmatprep.mubr.bf16.mxu0 0
        %858 = vmatmul.mubr.bf16.gmra.mxu0 %v725
        %v859 = vpop.f32.mrf.mxu0
        %v860 = vadd.f32 0.0, %v859
        %v861 = vpop.f32.mrf.mxu0
        %v862 = vpop.f32.mrf.mxu0
        %v863 = vadd.f32 0.0, %v862
        %v864 = vpop.f32.mrf.mxu0
        %865 = vmatprep.mubr.bf16.mxu0 0
        %866 = vmatmul.mubr.bf16.gmra.mxu0 %v726
        %v867 = vpop.f32.mrf.mxu0
        %v868 = vadd.f32 0.0, %v867
        %v869 = vpop.f32.mrf.mxu0
        %v870 = vpop.f32.mrf.mxu0
        %v871 = vadd.f32 0.0, %v870
        %v872 = vpop.f32.mrf.mxu0
        %873 = vmatprep.mubr.bf16.mxu0 0
        %874 = vmatmul.mubr.bf16.gmra.mxu0 %v727
        %v875 = vpop.f32.mrf.mxu0
        %v876 = vadd.f32 0.0, %v875
        %v877 = vpop.f32.mrf.mxu0
        %v878 = vpop.f32.mrf.mxu0
        %v879 = vadd.f32 0.0, %v878
        %v880 = vpop.f32.mrf.mxu0
        %881 = vmatprep.mubr.bf16.mxu0 0
        %882 = vmatmul.mubr.bf16.gmra.mxu0 %v728
        %v883 = vpop.f32.mrf.mxu0
        %v884 = vadd.f32 0.0, %v883
        %v885 = vpop.f32.mrf.mxu0
        %v886 = vpop.f32.mrf.mxu0
        %v887 = vadd.f32 0.0, %v886
        %v888 = vpop.f32.mrf.mxu0
        %889 = vdwg.mxu0
        %v890 = vmax.f32 %v828, 0.0
        %v891 = vmax.f32 %v831, 0.0
        %v892 = vmax.f32 %v836, 0.0
        %v893 = vmax.f32 %v839, 0.0
        %v894 = vmax.f32 %v844, 0.0
        %v895 = vmax.f32 %v847, 0.0
        %v896 = vmax.f32 %v852, 0.0
        %v897 = vmax.f32 %v855, 0.0
        %v898 = vmax.f32 %v860, 0.0
        %v899 = vmax.f32 %v863, 0.0
        %v900 = vmax.f32 %v868, 0.0
        %v901 = vmax.f32 %v871, 0.0
        %v902 = vmax.f32 %v876, 0.0
        %v903 = vmax.f32 %v879, 0.0
        %v904 = vmax.f32 %v884, 0.0
        %v905 = vmax.f32 %v887, 0.0
        %v906 = vpack.c.bf16 %v891, %v890
        %v907 = vpack.c.bf16 %v893, %v892
        %v908 = vpack.c.bf16 %v895, %v894
        %v909 = vpack.c.bf16 %v897, %v896
        %v910 = vpack.c.bf16 %v899, %v898
        %v911 = vpack.c.bf16 %v901, %v900
        %v912 = vpack.c.bf16 %v903, %v902
        %v913 = vpack.c.bf16 %v905, %v904
        %914 = vmatprep.subr.bf16.mxu0 0
        %915 = vmatpush1.bf16.msra.mxu0 0
        %916 = vmatprep.subr.bf16.mxu0 0
        %917 = vmatpush1.bf16.msra.mxu0 0
        %918 = vmatprep.subr.bf16.mxu0 0
        %919 = vmatpush1.bf16.msra.mxu0 0
        %920 = vmatprep.subr.bf16.mxu0 0
        %921 = vmatpush1.bf16.msra.mxu0 0
        %922 = vmatprep.subr.bf16.mxu0 0
        %923 = vmatpush1.bf16.msra.mxu0 %v909
        %924 = vmatprep.subr.bf16.mxu0 0
        %925 = vmatpush1.bf16.msra.mxu0 %v908
        %926 = vmatprep.subr.bf16.mxu0 0
        %927 = vmatpush1.bf16.msra.mxu0 %v907
        %928 = vmatprep.subr.bf16.mxu0 0
        %929 = vmatpush1.bf16.msra.mxu0 %v906
        %930 = vmatprep.subr.bf16.mxu0 0
        %931 = vmatpush2.bf16.msra.mxu0 0
        %932 = vmatprep.subr.bf16.mxu0 0
        %933 = vmatpush2.bf16.msra.mxu0 0
        %934 = vmatprep.subr.bf16.mxu0 0
        %935 = vmatpush2.bf16.msra.mxu0 0
        %936 = vmatprep.subr.bf16.mxu0 0
        %937 = vmatpush2.bf16.msra.mxu0 0
        %938 = vmatprep.subr.bf16.mxu0 0
        %939 = vmatpush2.bf16.msra.mxu0 0
        %940 = vmatprep.subr.bf16.mxu0 0
        %941 = vmatpush2.bf16.msra.mxu0 0
        %942 = vmatprep.subr.bf16.mxu0 0
        %943 = vmatpush2.bf16.msra.mxu0 0
        %944 = vmatprep.subr.bf16.mxu0 0
        %945 = vmatpush2.bf16.msra.mxu0 0
        %946 = vmatprep.mubr.bf16.mxu0 0
        %947 = vmatmul.mubr.bf16.gmra.mxu0 %v524
        %v948 = vpop.f32.mrf.mxu0
        %v949 = vadd.f32 0.0, %v948
        %v950 = vpop.f32.mrf.mxu0
        %v951 = vpop.f32.mrf.mxu0
        %v952 = vadd.f32 0.0, %v951
        %v953 = vpop.f32.mrf.mxu0
        %954 = vmatprep.mubr.bf16.mxu0 0
        %955 = vmatmul.mubr.bf16.gmra.mxu0 %v527
        %v956 = vpop.f32.mrf.mxu0
        %v957 = vadd.f32 0.0, %v956
        %v958 = vpop.f32.mrf.mxu0
        %v959 = vpop.f32.mrf.mxu0
        %v960 = vadd.f32 0.0, %v959
        %v961 = vpop.f32.mrf.mxu0
        %962 = vmatprep.mubr.bf16.mxu0 0
        %963 = vmatmul.mubr.bf16.gmra.mxu0 %v530
        %v964 = vpop.f32.mrf.mxu0
        %v965 = vadd.f32 0.0, %v964
        %v966 = vpop.f32.mrf.mxu0
        %v967 = vpop.f32.mrf.mxu0
        %v968 = vadd.f32 0.0, %v967
        %v969 = vpop.f32.mrf.mxu0
        %970 = vmatprep.mubr.bf16.mxu0 0
        %971 = vmatmul.mubr.bf16.gmra.mxu0 %v533
        %v972 = vpop.f32.mrf.mxu0
        %v973 = vadd.f32 0.0, %v972
        %v974 = vpop.f32.mrf.mxu0
        %v975 = vpop.f32.mrf.mxu0
        %v976 = vadd.f32 0.0, %v975
        %v977 = vpop.f32.mrf.mxu0
        %978 = vdwg.mxu0
        %979 = vmatprep.subr.bf16.mxu0 0
        %980 = vmatpush1.bf16.msra.mxu0 0
        %981 = vmatprep.subr.bf16.mxu0 0
        %982 = vmatpush1.bf16.msra.mxu0 0
        %983 = vmatprep.subr.bf16.mxu0 0
        %984 = vmatpush1.bf16.msra.mxu0 0
        %985 = vmatprep.subr.bf16.mxu0 0
        %986 = vmatpush1.bf16.msra.mxu0 0
        %987 = vmatprep.subr.bf16.mxu0 0
        %988 = vmatpush1.bf16.msra.mxu0 %v913
        %989 = vmatprep.subr.bf16.mxu0 0
        %990 = vmatpush1.bf16.msra.mxu0 %v912
        %991 = vmatprep.subr.bf16.mxu0 0
        %992 = vmatpush1.bf16.msra.mxu0 %v911
        %993 = vmatprep.subr.bf16.mxu0 0
        %994 = vmatpush1.bf16.msra.mxu0 %v910
        %995 = vmatprep.subr.bf16.mxu0 0
        %996 = vmatpush2.bf16.msra.mxu0 0
        %997 = vmatprep.subr.bf16.mxu0 0
        %998 = vmatpush2.bf16.msra.mxu0 0
        %999 = vmatprep.subr.bf16.mxu0 0
        %1000 = vmatpush2.bf16.msra.mxu0 0
        %1001 = vmatprep.subr.bf16.mxu0 0
        %1002 = vmatpush2.bf16.msra.mxu0 0
        %1003 = vmatprep.subr.bf16.mxu0 0
        %1004 = vmatpush2.bf16.msra.mxu0 0
        %1005 = vmatprep.subr.bf16.mxu0 0
        %1006 = vmatpush2.bf16.msra.mxu0 0
        %1007 = vmatprep.subr.bf16.mxu0 0
        %1008 = vmatpush2.bf16.msra.mxu0 0
        %1009 = vmatprep.subr.bf16.mxu0 0
        %1010 = vmatpush2.bf16.msra.mxu0 0
        %1011 = vmatprep.mubr.bf16.mxu0 0
        %1012 = vmatmul.mubr.bf16.gmra.mxu0 %v645
        %v1013 = vpop.f32.mrf.mxu0
        %v1014 = vadd.f32 0.0, %v1013
        %v1015 = vpop.f32.mrf.mxu0
        %v1016 = vpop.f32.mrf.mxu0
        %v1017 = vadd.f32 0.0, %v1016
        %v1018 = vpop.f32.mrf.mxu0
        %1019 = vmatprep.mubr.bf16.mxu0 0
        %1020 = vmatmul.mubr.bf16.gmra.mxu0 %v648
        %v1021 = vpop.f32.mrf.mxu0
        %v1022 = vadd.f32 0.0, %v1021
        %v1023 = vpop.f32.mrf.mxu0
        %v1024 = vpop.f32.mrf.mxu0
        %v1025 = vadd.f32 0.0, %v1024
        %v1026 = vpop.f32.mrf.mxu0
        %1027 = vmatprep.mubr.bf16.mxu0 0
        %1028 = vmatmul.mubr.bf16.gmra.mxu0 %v651
        %v1029 = vpop.f32.mrf.mxu0
        %v1030 = vadd.f32 0.0, %v1029
        %v1031 = vpop.f32.mrf.mxu0
        %v1032 = vpop.f32.mrf.mxu0
        %v1033 = vadd.f32 0.0, %v1032
        %v1034 = vpop.f32.mrf.mxu0
        %1035 = vmatprep.mubr.bf16.mxu0 0
        %1036 = vmatmul.mubr.bf16.gmra.mxu0 %v654
        %v1037 = vpop.f32.mrf.mxu0
        %v1038 = vadd.f32 0.0, %v1037
        %v1039 = vpop.f32.mrf.mxu0
        %v1040 = vpop.f32.mrf.mxu0
        %v1041 = vadd.f32 0.0, %v1040
        %v1042 = vpop.f32.mrf.mxu0
        %1043 = vdwg.mxu0
        %v1044 = vpack.c.bf16 %v952, %v949
        %v1045 = vpack.c.bf16 %v960, %v957
        %v1046 = vpack.c.bf16 %v968, %v965
        %v1047 = vpack.c.bf16 %v976, %v973
        %v1048 = vpack.c.bf16 %v1017, %v1014
        %v1049 = vpack.c.bf16 %v1025, %v1022
        %v1050 = vpack.c.bf16 %v1033, %v1030
        %v1051 = vpack.c.bf16 %v1041, %v1038
        %v1052 = vld [vmem:[%s3] sm:$0xf]
        %v1053 = vld [vmem:[%s3 + $0x4] sm:$0xf]
        %v1054 = vld [vmem:[%s3 + $0x8] sm:$0xf]
        %v1055 = vld [vmem:[%s3 + $0xc] sm:$0xf]
        %v1056 = vld [vmem:[%s3 + $0x10] sm:$0xf]
        %v1057 = vld [vmem:[%s3 + $0x14] sm:$0xf]
        %v1058 = vld [vmem:[%s3 + $0x18] sm:$0xf]
        %v1059 = vld [vmem:[%s3 + $0x1c] sm:$0xf]
        %v1060 = vld [vmem:[%s3 + $0x20] sm:$0xf]
        %v1061 = vld [vmem:[%s3 + $0x24] sm:$0xf]
        %v1062 = vld [vmem:[%s3 + $0x28] sm:$0xf]
        %v1063 = vld [vmem:[%s3 + $0x2c] sm:$0xf]
        %v1064 = vld [vmem:[%s3 + $0x30] sm:$0xf]
        %v1065 = vld [vmem:[%s3 + $0x34] sm:$0xf]
        %v1066 = vld [vmem:[%s3 + $0x38] sm:$0xf]
        %v1067 = vld [vmem:[%s3 + $0x3c] sm:$0xf]
        %v1084 = vunpack.c.l.b16 %v1052
        %v1085 = vunpack.c.l.b16 %v1053
        %v1086 = vunpack.c.l.b16 %v1054
        %v1087 = vunpack.c.l.b16 %v1055
        %v1088 = vunpack.c.l.b16 %v1056
        %v1089 = vunpack.c.l.b16 %v1057
        %v1090 = vunpack.c.l.b16 %v1058
        %v1091 = vunpack.c.l.b16 %v1059
        %v1092 = vunpack.c.l.b16 %v1060
        %v1093 = vunpack.c.l.b16 %v1061
        %v1094 = vunpack.c.l.b16 %v1062
        %v1095 = vunpack.c.l.b16 %v1063
        %v1096 = vunpack.c.l.b16 %v1064
        %v1097 = vunpack.c.l.b16 %v1065
        %v1098 = vunpack.c.l.b16 %v1066
        %v1099 = vunpack.c.l.b16 %v1067
        %v1100 = vpack.c.b16 %v1085, %v1084
        %v1101 = vpack.c.b16 %v1087, %v1086
        %v1102 = vpack.c.b16 %v1089, %v1088
        %v1103 = vpack.c.b16 %v1091, %v1090
        %v1104 = vpack.c.b16 %v1093, %v1092
        %v1105 = vpack.c.b16 %v1095, %v1094
        %v1106 = vpack.c.b16 %v1097, %v1096
        %v1107 = vpack.c.b16 %v1099, %v1098
        %1116 = vmatprep.subr.bf16.mxu0 0
        %1117 = vmatpush1.bf16.msra.mxu0 %v1107
        %1118 = vmatprep.subr.bf16.mxu0 0
        %1119 = vmatpush1.bf16.msra.mxu0 %v1106
        %1120 = vmatprep.subr.bf16.mxu0 0
        %1121 = vmatpush1.bf16.msra.mxu0 %v1105
        %1122 = vmatprep.subr.bf16.mxu0 0
        %1123 = vmatpush1.bf16.msra.mxu0 %v1104
        %1124 = vmatprep.subr.bf16.mxu0 0
        %1125 = vmatpush1.bf16.msra.mxu0 %v1103
        %1126 = vmatprep.subr.bf16.mxu0 0
        %1127 = vmatpush1.bf16.msra.mxu0 %v1102
        %1128 = vmatprep.subr.bf16.mxu0 0
        %1129 = vmatpush1.bf16.msra.mxu0 %v1101
        %1130 = vmatprep.subr.bf16.mxu0 0
        %1131 = vmatpush1.bf16.msra.mxu0 %v1100
        %1132 = vmatprep.subr.bf16.mxu0 0
        %1133 = vmatpush2.bf16.msra.mxu0 0
        %1134 = vmatprep.subr.bf16.mxu0 0
        %1135 = vmatpush2.bf16.msra.mxu0 0
        %1136 = vmatprep.subr.bf16.mxu0 0
        %1137 = vmatpush2.bf16.msra.mxu0 0
        %1138 = vmatprep.subr.bf16.mxu0 0
        %1139 = vmatpush2.bf16.msra.mxu0 0
        %1140 = vmatprep.subr.bf16.mxu0 0
        %1141 = vmatpush2.bf16.msra.mxu0 0
        %1142 = vmatprep.subr.bf16.mxu0 0
        %1143 = vmatpush2.bf16.msra.mxu0 0
        %1144 = vmatprep.subr.bf16.mxu0 0
        %1145 = vmatpush2.bf16.msra.mxu0 0
        %1146 = vmatprep.subr.bf16.mxu0 0
        %1147 = vmatpush2.bf16.msra.mxu0 0
        %1148 = vmatprep.mubr.bf16.mxu0 0
        %1149 = vmatmul.mubr.bf16.gmra.mxu0 %v1044
        %v1150 = vpop.f32.mrf.mxu0
        %v1151 = vadd.f32 0.0, %v1150
        %v1152 = vpop.f32.mrf.mxu0
        %v1153 = vpop.f32.mrf.mxu0
        %v1154 = vadd.f32 0.0, %v1153
        %v1155 = vpop.f32.mrf.mxu0
        %1156 = vmatprep.mubr.bf16.mxu0 0
        %1157 = vmatmul.mubr.bf16.gmra.mxu0 %v1045
        %v1158 = vpop.f32.mrf.mxu0
        %v1159 = vadd.f32 0.0, %v1158
        %v1160 = vpop.f32.mrf.mxu0
        %v1161 = vpop.f32.mrf.mxu0
        %v1162 = vadd.f32 0.0, %v1161
        %v1163 = vpop.f32.mrf.mxu0
        %1164 = vmatprep.mubr.bf16.mxu0 0
        %1165 = vmatmul.mubr.bf16.gmra.mxu0 %v1046
        %v1166 = vpop.f32.mrf.mxu0
        %v1167 = vadd.f32 0.0, %v1166
        %v1168 = vpop.f32.mrf.mxu0
        %v1169 = vpop.f32.mrf.mxu0
        %v1170 = vadd.f32 0.0, %v1169
        %v1171 = vpop.f32.mrf.mxu0
        %1172 = vmatprep.mubr.bf16.mxu0 0
        %1173 = vmatmul.mubr.bf16.gmra.mxu0 %v1047
        %v1174 = vpop.f32.mrf.mxu0
        %v1175 = vadd.f32 0.0, %v1174
        %v1176 = vpop.f32.mrf.mxu0
        %v1177 = vpop.f32.mrf.mxu0
        %v1178 = vadd.f32 0.0, %v1177
        %v1179 = vpop.f32.mrf.mxu0
        %1180 = vmatprep.mubr.bf16.mxu0 0
        %1181 = vmatmul.mubr.bf16.gmra.mxu0 %v1048
        %v1182 = vpop.f32.mrf.mxu0
        %v1183 = vadd.f32 0.0, %v1182
        %v1184 = vpop.f32.mrf.mxu0
        %v1185 = vpop.f32.mrf.mxu0
        %v1186 = vadd.f32 0.0, %v1185
        %v1187 = vpop.f32.mrf.mxu0
        %1188 = vmatprep.mubr.bf16.mxu0 0
        %1189 = vmatmul.mubr.bf16.gmra.mxu0 %v1049
        %v1190 = vpop.f32.mrf.mxu0
        %v1191 = vadd.f32 0.0, %v1190
        %v1192 = vpop.f32.mrf.mxu0
        %v1193 = vpop.f32.mrf.mxu0
        %v1194 = vadd.f32 0.0, %v1193
        %v1195 = vpop.f32.mrf.mxu0
        %1196 = vmatprep.mubr.bf16.mxu0 0
        %1197 = vmatmul.mubr.bf16.gmra.mxu0 %v1050
        %v1198 = vpop.f32.mrf.mxu0
        %v1199 = vadd.f32 0.0, %v1198
        %v1200 = vpop.f32.mrf.mxu0
        %v1201 = vpop.f32.mrf.mxu0
        %v1202 = vadd.f32 0.0, %v1201
        %v1203 = vpop.f32.mrf.mxu0
        %1204 = vmatprep.mubr.bf16.mxu0 0
        %1205 = vmatmul.mubr.bf16.gmra.mxu0 %v1051
        %v1206 = vpop.f32.mrf.mxu0
        %v1207 = vadd.f32 0.0, %v1206
        %v1208 = vpop.f32.mrf.mxu0
        %v1209 = vpop.f32.mrf.mxu0
        %v1210 = vadd.f32 0.0, %v1209
        %v1211 = vpop.f32.mrf.mxu0
        %1212 = vdwg.mxu0
        %v1213 = vmax.f32 %v1151, 0.0
        %v1214 = vmax.f32 %v1154, 0.0
        %v1215 = vmax.f32 %v1159, 0.0
        %v1216 = vmax.f32 %v1162, 0.0
        %v1217 = vmax.f32 %v1167, 0.0
        %v1218 = vmax.f32 %v1170, 0.0
        %v1219 = vmax.f32 %v1175, 0.0
        %v1220 = vmax.f32 %v1178, 0.0
        %v1221 = vmax.f32 %v1183, 0.0
        %v1222 = vmax.f32 %v1186, 0.0
        %v1223 = vmax.f32 %v1191, 0.0
        %v1224 = vmax.f32 %v1194, 0.0
        %v1225 = vmax.f32 %v1199, 0.0
        %v1226 = vmax.f32 %v1202, 0.0
        %v1227 = vmax.f32 %v1207, 0.0
        %v1228 = vmax.f32 %v1210, 0.0
        %v1229 = vpack.c.bf16 %v1214, %v1213
        %v1230 = vpack.c.bf16 %v1216, %v1215
        %v1231 = vpack.c.bf16 %v1218, %v1217
        %v1232 = vpack.c.bf16 %v1220, %v1219
        %v1233 = vpack.c.bf16 %v1222, %v1221
        %v1234 = vpack.c.bf16 %v1224, %v1223
        %v1235 = vpack.c.bf16 %v1226, %v1225
        %v1236 = vpack.c.bf16 %v1228, %v1227
        %v1237 = vld [vmem:[%s4] sm:$0xff]
        %v1238 = vld [vmem:[%s4 + $0x8] sm:$0xff]
        %v1239 = vld [vmem:[%s4 + $0x10] sm:$0xff]
        %v1240 = vld [vmem:[%s4 + $0x18] sm:$0xff]
        %v1241 = vld [vmem:[%s4 + $0x20] sm:$0xff]
        %v1242 = vld [vmem:[%s4 + $0x28] sm:$0xff]
        %v1243 = vld [vmem:[%s4 + $0x30] sm:$0xff]
        %v1244 = vld [vmem:[%s4 + $0x38] sm:$0xff]
        %v1245 = vld [vmem:[%s4 + $0x40] sm:$0xff]
        %v1246 = vld [vmem:[%s4 + $0x48] sm:$0xff]
        %v1247 = vld [vmem:[%s4 + $0x50] sm:$0xff]
        %v1248 = vld [vmem:[%s4 + $0x58] sm:$0xff]
        %v1249 = vld [vmem:[%s4 + $0x60] sm:$0xff]
        %v1250 = vld [vmem:[%s4 + $0x68] sm:$0xff]
        %v1251 = vld [vmem:[%s4 + $0x70] sm:$0xff]
        %v1252 = vld [vmem:[%s4 + $0x78] sm:$0xff]
        %v1253 = vld [vmem:[%s5] sm:$0x3]
        %v1255 = vlaneseq
        %v1256 = vshrl.u32 %v1255, 7
        %v1257 = vsub.s32 0, %v1256
        %v1258 = vrot.slane %v1253, %v1257
        %v1259 = vlaneseq
        %v1260 = vshrl.u32 %v1259, 7
        %v1261 = vsub.s32 1, %v1260
        %v1262 = vrot.slane %v1253, %v1261
        %v1281 = vunpack.c.l.b16 %v1237
        %v1282 = vunpack.c.h.b16 %v1237
        %v1283 = vunpack.c.l.b16 %v1238
        %v1284 = vunpack.c.h.b16 %v1238
        %v1285 = vunpack.c.l.b16 %v1239
        %v1286 = vunpack.c.h.b16 %v1239
        %v1287 = vunpack.c.l.b16 %v1240
        %v1288 = vunpack.c.h.b16 %v1240
        %v1289 = vunpack.c.l.b16 %v1241
        %v1290 = vunpack.c.h.b16 %v1241
        %v1291 = vunpack.c.l.b16 %v1242
        %v1292 = vunpack.c.h.b16 %v1242
        %v1293 = vunpack.c.l.b16 %v1243
        %v1294 = vunpack.c.h.b16 %v1243
        %v1295 = vunpack.c.l.b16 %v1244
        %v1296 = vunpack.c.h.b16 %v1244
        %v1297 = vunpack.c.l.b16 %v1245
        %v1298 = vunpack.c.h.b16 %v1245
        %v1299 = vunpack.c.l.b16 %v1246
        %v1300 = vunpack.c.h.b16 %v1246
        %v1301 = vunpack.c.l.b16 %v1247
        %v1302 = vunpack.c.h.b16 %v1247
        %v1303 = vunpack.c.l.b16 %v1248
        %v1304 = vunpack.c.h.b16 %v1248
        %v1305 = vunpack.c.l.b16 %v1249
        %v1306 = vunpack.c.h.b16 %v1249
        %v1307 = vunpack.c.l.b16 %v1250
        %v1308 = vunpack.c.h.b16 %v1250
        %v1309 = vunpack.c.l.b16 %v1251
        %v1310 = vunpack.c.h.b16 %v1251
        %v1311 = vunpack.c.l.b16 %v1252
        %v1312 = vunpack.c.h.b16 %v1252
        %v1313 = vpack.c.b16 %v1283, %v1281
        %v1314 = vpack.c.b16 %v1284, %v1282
        %v1315 = vpack.c.b16 %v1287, %v1285
        %v1316 = vpack.c.b16 %v1288, %v1286
        %v1317 = vpack.c.b16 %v1291, %v1289
        %v1318 = vpack.c.b16 %v1292, %v1290
        %v1319 = vpack.c.b16 %v1295, %v1293
        %v1320 = vpack.c.b16 %v1296, %v1294
        %v1321 = vpack.c.b16 %v1299, %v1297
        %v1322 = vpack.c.b16 %v1300, %v1298
        %v1323 = vpack.c.b16 %v1303, %v1301
        %v1324 = vpack.c.b16 %v1304, %v1302
        %v1325 = vpack.c.b16 %v1307, %v1305
        %v1326 = vpack.c.b16 %v1308, %v1306
        %v1327 = vpack.c.b16 %v1311, %v1309
        %v1328 = vpack.c.b16 %v1312, %v1310
        %1345 = vmatprep.subr.bf16.mxu0 %v1328
        %1346 = vmatpush1.bf16.msra.mxu0 %v1327
        %1347 = vmatprep.subr.bf16.mxu0 %v1326
        %1348 = vmatpush1.bf16.msra.mxu0 %v1325
        %1349 = vmatprep.subr.bf16.mxu0 %v1324
        %1350 = vmatpush1.bf16.msra.mxu0 %v1323
        %1351 = vmatprep.subr.bf16.mxu0 %v1322
        %1352 = vmatpush1.bf16.msra.mxu0 %v1321
        %1353 = vmatprep.subr.bf16.mxu0 %v1320
        %1354 = vmatpush1.bf16.msra.mxu0 %v1319
        %1355 = vmatprep.subr.bf16.mxu0 %v1318
        %1356 = vmatpush1.bf16.msra.mxu0 %v1317
        %1357 = vmatprep.subr.bf16.mxu0 %v1316
        %1358 = vmatpush1.bf16.msra.mxu0 %v1315
        %1359 = vmatprep.subr.bf16.mxu0 %v1314
        %1360 = vmatpush1.bf16.msra.mxu0 %v1313
        %1361 = vmatprep.subr.bf16.mxu0 0
        %1362 = vmatpush2.bf16.msra.mxu0 0
        %1363 = vmatprep.subr.bf16.mxu0 0
        %1364 = vmatpush2.bf16.msra.mxu0 0
        %1365 = vmatprep.subr.bf16.mxu0 0
        %1366 = vmatpush2.bf16.msra.mxu0 0
        %1367 = vmatprep.subr.bf16.mxu0 0
        %1368 = vmatpush2.bf16.msra.mxu0 0
        %1369 = vmatprep.subr.bf16.mxu0 0
        %1370 = vmatpush2.bf16.msra.mxu0 0
        %1371 = vmatprep.subr.bf16.mxu0 0
        %1372 = vmatpush2.bf16.msra.mxu0 0
        %1373 = vmatprep.subr.bf16.mxu0 0
        %1374 = vmatpush2.bf16.msra.mxu0 0
        %1375 = vmatprep.subr.bf16.mxu0 0
        %1376 = vmatpush2.bf16.msra.mxu0 0
        %1377 = vmatprep.mubr.bf16.mxu0 0
        %1378 = vmatmul.mubr.bf16.gmra.mxu0 %v1229
        %v1379 = vpop.f32.mrf.mxu0
        %v1380 = vadd.f32 %v1258, %v1379
        %v1381 = vpop.f32.mrf.mxu0
        %v1382 = vadd.f32 %v1262, %v1381
        %v1383 = vpop.f32.mrf.mxu0
        %v1384 = vadd.f32 %v1258, %v1383
        %v1385 = vpop.f32.mrf.mxu0
        %v1386 = vadd.f32 %v1262, %v1385
        %1387 = vmatprep.mubr.bf16.mxu0 0
        %1388 = vmatmul.mubr.bf16.gmra.mxu0 %v1230
        %v1389 = vpop.f32.mrf.mxu0
        %v1390 = vadd.f32 %v1258, %v1389
        %v1391 = vpop.f32.mrf.mxu0
        %v1392 = vadd.f32 %v1262, %v1391
        %v1393 = vpop.f32.mrf.mxu0
        %v1394 = vadd.f32 %v1258, %v1393
        %v1395 = vpop.f32.mrf.mxu0
        %v1396 = vadd.f32 %v1262, %v1395
        %1397 = vmatprep.mubr.bf16.mxu0 0
        %1398 = vmatmul.mubr.bf16.gmra.mxu0 %v1231
        %v1399 = vpop.f32.mrf.mxu0
        %v1400 = vadd.f32 %v1258, %v1399
        %v1401 = vpop.f32.mrf.mxu0
        %v1402 = vadd.f32 %v1262, %v1401
        %v1403 = vpop.f32.mrf.mxu0
        %v1404 = vadd.f32 %v1258, %v1403
        %v1405 = vpop.f32.mrf.mxu0
        %v1406 = vadd.f32 %v1262, %v1405
        %1407 = vmatprep.mubr.bf16.mxu0 0
        %1408 = vmatmul.mubr.bf16.gmra.mxu0 %v1232
        %v1409 = vpop.f32.mrf.mxu0
        %v1410 = vadd.f32 %v1258, %v1409
        %v1411 = vpop.f32.mrf.mxu0
        %v1412 = vadd.f32 %v1262, %v1411
        %v1413 = vpop.f32.mrf.mxu0
        %v1414 = vadd.f32 %v1258, %v1413
        %v1415 = vpop.f32.mrf.mxu0
        %v1416 = vadd.f32 %v1262, %v1415
        %1417 = vmatprep.mubr.bf16.mxu0 0
        %1418 = vmatmul.mubr.bf16.gmra.mxu0 %v1233
        %v1419 = vpop.f32.mrf.mxu0
        %v1420 = vadd.f32 %v1258, %v1419
        %v1421 = vpop.f32.mrf.mxu0
        %v1422 = vadd.f32 %v1262, %v1421
        %v1423 = vpop.f32.mrf.mxu0
        %v1424 = vadd.f32 %v1258, %v1423
        %v1425 = vpop.f32.mrf.mxu0
        %v1426 = vadd.f32 %v1262, %v1425
        %1427 = vmatprep.mubr.bf16.mxu0 0
        %1428 = vmatmul.mubr.bf16.gmra.mxu0 %v1234
        %v1429 = vpop.f32.mrf.mxu0
        %v1430 = vadd.f32 %v1258, %v1429
        %v1431 = vpop.f32.mrf.mxu0
        %v1432 = vadd.f32 %v1262, %v1431
        %v1433 = vpop.f32.mrf.mxu0
        %v1434 = vadd.f32 %v1258, %v1433
        %v1435 = vpop.f32.mrf.mxu0
        %v1436 = vadd.f32 %v1262, %v1435
        %1437 = vmatprep.mubr.bf16.mxu0 0
        %1438 = vmatmul.mubr.bf16.gmra.mxu0 %v1235
        %v1439 = vpop.f32.mrf.mxu0
        %v1440 = vadd.f32 %v1258, %v1439
        %v1441 = vpop.f32.mrf.mxu0
        %v1442 = vadd.f32 %v1262, %v1441
        %v1443 = vpop.f32.mrf.mxu0
        %v1444 = vadd.f32 %v1258, %v1443
        %v1445 = vpop.f32.mrf.mxu0
        %v1446 = vadd.f32 %v1262, %v1445
        %1447 = vmatprep.mubr.bf16.mxu0 0
        %1448 = vmatmul.mubr.bf16.gmra.mxu0 %v1236
        %v1449 = vpop.f32.mrf.mxu0
        %v1450 = vadd.f32 %v1258, %v1449
        %v1451 = vpop.f32.mrf.mxu0
        %v1452 = vadd.f32 %v1262, %v1451
        %v1453 = vpop.f32.mrf.mxu0
        %v1454 = vadd.f32 %v1258, %v1453
        %v1455 = vpop.f32.mrf.mxu0
        %v1456 = vadd.f32 %v1262, %v1455
        %1457 = vdwg.mxu0
        %v1458 = vmul.f32 %v1382, 0.5
        %v1459 = vmul.f32 %v1386, 0.5
        %v1460 = vmul.f32 %v1392, 0.5
        %v1461 = vmul.f32 %v1396, 0.5
        %v1462 = vmul.f32 %v1402, 0.5
        %v1463 = vmul.f32 %v1406, 0.5
        %v1464 = vmul.f32 %v1412, 0.5
        %v1465 = vmul.f32 %v1416, 0.5
        %v1466 = vmul.f32 %v1422, 0.5
        %v1467 = vmul.f32 %v1426, 0.5
        %v1468 = vmul.f32 %v1432, 0.5
        %v1469 = vmul.f32 %v1436, 0.5
        %v1470 = vmul.f32 %v1442, 0.5
        %v1471 = vmul.f32 %v1446, 0.5
        %v1472 = vmul.f32 %v1452, 0.5
        %v1473 = vmul.f32 %v1456, 0.5
        %v1474 = vmul.f32 %v1458, 1.442695
        %v1475 = vpow.pop %v1474
        %v1476 = vmul.f32 %v1459, 1.442695
        %v1477 = vpow.pop %v1476
        %v1478 = vmul.f32 %v1460, 1.442695
        %v1479 = vpow.pop %v1478
        %v1480 = vmul.f32 %v1461, 1.442695
        %v1481 = vpow.pop %v1480
        %v1482 = vmul.f32 %v1462, 1.442695
        %v1483 = vpow.pop %v1482
        %v1484 = vmul.f32 %v1463, 1.442695
        %v1485 = vpow.pop %v1484
        %v1486 = vmul.f32 %v1464, 1.442695
        %v1487 = vpow.pop %v1486
        %v1488 = vmul.f32 %v1465, 1.442695
        %v1489 = vpow.pop %v1488
        %v1490 = vmul.f32 %v1466, 1.442695
        %v1491 = vpow.pop %v1490
        %v1492 = vmul.f32 %v1467, 1.442695
        %v1493 = vpow.pop %v1492
        %v1494 = vmul.f32 %v1468, 1.442695
        %v1495 = vpow.pop %v1494
        %v1496 = vmul.f32 %v1469, 1.442695
        %v1497 = vpow.pop %v1496
        %v1498 = vmul.f32 %v1470, 1.442695
        %v1499 = vpow.pop %v1498
        %v1500 = vmul.f32 %v1471, 1.442695
        %v1501 = vpow.pop %v1500
        %v1502 = vmul.f32 %v1472, 1.442695
        %v1503 = vpow.pop %v1502
        %v1504 = vmul.f32 %v1473, 1.442695
        %v1505 = vpow.pop %v1504
        %v1506 = vld [vmem:[%s435] sm:$0xf]
        %v1507 = vld [vmem:[%s435 + $0x4] sm:$0xf]
        %v1508 = vld [vmem:[%s435 + $0x8] sm:$0xf]
        %v1509 = vld [vmem:[%s435 + $0xc] sm:$0xf]
        %v1510 = vld [vmem:[%s435 + $0x10] sm:$0xf]
        %v1511 = vld [vmem:[%s435 + $0x14] sm:$0xf]
        %v1512 = vld [vmem:[%s435 + $0x18] sm:$0xf]
        %v1513 = vld [vmem:[%s435 + $0x1c] sm:$0xf]
        %v1514 = vld [vmem:[%s435 + $0x20] sm:$0xf]
        %v1515 = vld [vmem:[%s435 + $0x24] sm:$0xf]
        %v1516 = vld [vmem:[%s435 + $0x28] sm:$0xf]
        %v1517 = vld [vmem:[%s435 + $0x2c] sm:$0xf]
        %v1518 = vld [vmem:[%s435 + $0x30] sm:$0xf]
        %v1519 = vld [vmem:[%s435 + $0x34] sm:$0xf]
        %v1520 = vld [vmem:[%s435 + $0x38] sm:$0xf]
        %v1521 = vld [vmem:[%s435 + $0x3c] sm:$0xf]
        %v1522 = vunpack.c.l.bf16 %v1506
        %v1523 = vunpack.c.l.bf16 %v1507
        %v1524 = vunpack.c.l.bf16 %v1508
        %v1525 = vunpack.c.l.bf16 %v1509
        %v1526 = vunpack.c.l.bf16 %v1510
        %v1527 = vunpack.c.l.bf16 %v1511
        %v1528 = vunpack.c.l.bf16 %v1512
        %v1529 = vunpack.c.l.bf16 %v1513
        %v1530 = vunpack.c.l.bf16 %v1514
        %v1531 = vunpack.c.l.bf16 %v1515
        %v1532 = vunpack.c.l.bf16 %v1516
        %v1533 = vunpack.c.l.bf16 %v1517
        %v1534 = vunpack.c.l.bf16 %v1518
        %v1535 = vunpack.c.l.bf16 %v1519
        %v1536 = vunpack.c.l.bf16 %v1520
        %v1537 = vunpack.c.l.bf16 %v1521
        %v1538 = vmul.f32 %v1522, %v1475
        %v1539 = vmul.f32 %v1523, %v1477
        %v1540 = vmul.f32 %v1524, %v1479
        %v1541 = vmul.f32 %v1525, %v1481
        %v1542 = vmul.f32 %v1526, %v1483
        %v1543 = vmul.f32 %v1527, %v1485
        %v1544 = vmul.f32 %v1528, %v1487
        %v1545 = vmul.f32 %v1529, %v1489
        %v1546 = vmul.f32 %v1530, %v1491
        %v1547 = vmul.f32 %v1531, %v1493
        %v1548 = vmul.f32 %v1532, %v1495
        %v1549 = vmul.f32 %v1533, %v1497
        %v1550 = vmul.f32 %v1534, %v1499
        %v1551 = vmul.f32 %v1535, %v1501
        %v1552 = vmul.f32 %v1536, %v1503
        %v1553 = vmul.f32 %v1537, %v1505
        %v1554 = vadd.f32 %v1380, %v1538
        %v1555 = vadd.f32 %v1384, %v1539
        %v1556 = vadd.f32 %v1390, %v1540
        %v1557 = vadd.f32 %v1394, %v1541
        %v1558 = vadd.f32 %v1400, %v1542
        %v1559 = vadd.f32 %v1404, %v1543
        %v1560 = vadd.f32 %v1410, %v1544
        %v1561 = vadd.f32 %v1414, %v1545
        %v1562 = vadd.f32 %v1420, %v1546
        %v1563 = vadd.f32 %v1424, %v1547
        %v1564 = vadd.f32 %v1430, %v1548
        %v1565 = vadd.f32 %v1434, %v1549
        %v1566 = vadd.f32 %v1440, %v1550
        %v1567 = vadd.f32 %v1444, %v1551
        %v1568 = vadd.f32 %v1450, %v1552
        %v1569 = vadd.f32 %v1454, %v1553
        %1570 = vst [vmem:[%s402] sm:$0xff] %v1380
        %1571 = vst [vmem:[%s402 + $0x8] sm:$0xff] %v1384
        %1572 = vst [vmem:[%s402 + $0x10] sm:$0xff] %v1390
        %1573 = vst [vmem:[%s402 + $0x18] sm:$0xff] %v1394
        %1574 = vst [vmem:[%s402 + $0x20] sm:$0xff] %v1400
        %1575 = vst [vmem:[%s402 + $0x28] sm:$0xff] %v1404
        %1576 = vst [vmem:[%s402 + $0x30] sm:$0xff] %v1410
        %1577 = vst [vmem:[%s402 + $0x38] sm:$0xff] %v1414
        %1578 = vst [vmem:[%s402 + $0x40] sm:$0xff] %v1420
        %1579 = vst [vmem:[%s402 + $0x48] sm:$0xff] %v1424
        %1580 = vst [vmem:[%s402 + $0x50] sm:$0xff] %v1430
        %1581 = vst [vmem:[%s402 + $0x58] sm:$0xff] %v1434
        %1582 = vst [vmem:[%s402 + $0x60] sm:$0xff] %v1440
        %1583 = vst [vmem:[%s402 + $0x68] sm:$0xff] %v1444
        %1584 = vst [vmem:[%s402 + $0x70] sm:$0xff] %v1450
        %1585 = vst [vmem:[%s402 + $0x78] sm:$0xff] %v1454
        %1586 = vst [vmem:[%s409] sm:$0xff] %v1382
        %1587 = vst [vmem:[%s409 + $0x8] sm:$0xff] %v1386
        %1588 = vst [vmem:[%s409 + $0x10] sm:$0xff] %v1392
        %1589 = vst [vmem:[%s409 + $0x18] sm:$0xff] %v1396
        %1590 = vst [vmem:[%s409 + $0x20] sm:$0xff] %v1402
        %1591 = vst [vmem:[%s409 + $0x28] sm:$0xff] %v1406
        %1592 = vst [vmem:[%s409 + $0x30] sm:$0xff] %v1412
        %1593 = vst [vmem:[%s409 + $0x38] sm:$0xff] %v1416
        %1594 = vst [vmem:[%s409 + $0x40] sm:$0xff] %v1422
        %1595 = vst [vmem:[%s409 + $0x48] sm:$0xff] %v1426
        %1596 = vst [vmem:[%s409 + $0x50] sm:$0xff] %v1432
        %1597 = vst [vmem:[%s409 + $0x58] sm:$0xff] %v1436
        %1598 = vst [vmem:[%s409 + $0x60] sm:$0xff] %v1442
        %1599 = vst [vmem:[%s409 + $0x68] sm:$0xff] %v1446
        %1600 = vst [vmem:[%s409 + $0x70] sm:$0xff] %v1452
        %1601 = vst [vmem:[%s409 + $0x78] sm:$0xff] %v1456
        %v1602 = vadd.f32 %v1554, %v1555
        %v1603 = vadd.f32 %v1602, %v1556
        %v1604 = vadd.f32 %v1603, %v1557
        %v1605 = vadd.f32 %v1604, %v1558
        %v1606 = vadd.f32 %v1605, %v1559
        %v1607 = vadd.f32 %v1606, %v1560
        %v1608 = vadd.f32 %v1607, %v1561
        %v1609 = vrot.slane %v1608, 4
        %v1610 = vadd.f32 %v1608, %v1609
        %v1611 = vrot.slane %v1610, 2
        %v1612 = vadd.f32 %v1610, %v1611
        %v1613 = vrot.slane %v1612, 1
        %v1614 = vadd.f32 %v1612, %v1613
        %v1615 = vadd.f32 %v1562, %v1563
        %v1616 = vadd.f32 %v1615, %v1564
        %v1617 = vadd.f32 %v1616, %v1565
        %v1618 = vadd.f32 %v1617, %v1566
        %v1619 = vadd.f32 %v1618, %v1567
        %v1620 = vadd.f32 %v1619, %v1568
        %v1621 = vadd.f32 %v1620, %v1569
        %v1622 = vrot.slane %v1621, 4
        %v1623 = vadd.f32 %v1621, %v1622
        %v1624 = vrot.slane %v1623, 2
        %v1625 = vadd.f32 %v1623, %v1624
        %v1626 = vrot.slane %v1625, 1
        %v1627 = vadd.f32 %v1625, %v1626
        %v1628 = vmul.f32 %v1614, 0.015625
        %v1629 = vmul.f32 %v1627, 0.015625
        %1630 = vst [vmem:[%s443] sm:$0x1] %v1628
        %1631 = vst [vmem:[%s443 + $0x1] sm:$0x1] %v1629
        %v1632 = vpack.c.bf16 %v1555, %v1554
        %v1633 = vpack.c.bf16 %v1557, %v1556
        %v1634 = vpack.c.bf16 %v1559, %v1558
        %v1635 = vpack.c.bf16 %v1561, %v1560
        %v1636 = vpack.c.bf16 %v1563, %v1562
        %v1637 = vpack.c.bf16 %v1565, %v1564
        %v1638 = vpack.c.bf16 %v1567, %v1566
        %v1639 = vpack.c.bf16 %v1569, %v1568
        %1640 = vmatprep.subr.bf16.mxu0 0
        %1641 = vmatpush1.bf16.xpose.msra.mxu0 0
        %1642 = vmatprep.subr.bf16.mxu0 0
        %1643 = vmatpush1.bf16.xpose.msra.mxu0 0
        %1644 = vmatprep.subr.bf16.mxu0 0
        %1645 = vmatpush1.bf16.xpose.msra.mxu0 0
        %1646 = vmatprep.subr.bf16.mxu0 0
        %1647 = vmatpush1.bf16.xpose.msra.mxu0 0
        %1648 = vmatprep.subr.bf16.mxu0 0
        %1649 = vmatpush1.bf16.xpose.msra.mxu0 %v1635
        %1650 = vmatprep.subr.bf16.mxu0 0
        %1651 = vmatpush1.bf16.xpose.msra.mxu0 %v1634
        %1652 = vmatprep.subr.bf16.mxu0 0
        %1653 = vmatpush1.bf16.xpose.msra.mxu0 %v1633
        %1654 = vmatprep.subr.bf16.mxu0 0
        %1655 = vmatpush1.bf16.xpose.msra.mxu0 %v1632
        %1656 = vmatprep.subr.bf16.mxu0 0
        %1657 = vmatpush2.bf16.xpose.msra.mxu0 0
        %1658 = vmatprep.subr.bf16.mxu0 0
        %1659 = vmatpush2.bf16.xpose.msra.mxu0 0
        %1660 = vmatprep.subr.bf16.mxu0 0
        %1661 = vmatpush2.bf16.xpose.msra.mxu0 0
        %1662 = vmatprep.subr.bf16.mxu0 0
        %1663 = vmatpush2.bf16.xpose.msra.mxu0 0
        %1664 = vmatprep.subr.bf16.mxu0 0
        %1665 = vmatpush2.bf16.xpose.msra.mxu0 0
        %1666 = vmatprep.subr.bf16.mxu0 0
        %1667 = vmatpush2.bf16.xpose.msra.mxu0 0
        %1668 = vmatprep.subr.bf16.mxu0 0
        %1669 = vmatpush2.bf16.xpose.msra.mxu0 0
        %1670 = vmatprep.subr.bf16.mxu0 0
        %1671 = vmatpush2.bf16.xpose.msra.mxu0 0
        %1672 = vmatprep.mubr.bf16.mxu0 0
        %1673 = vmatmul.mubr.bf16.gmra.mxu0 %v1632
        %v1674 = vpop.f32.mrf.mxu0
        %v1675 = vadd.f32 0.0, %v1674
        %v1676 = vpop.f32.mrf.mxu0
        %v1677 = vpop.f32.mrf.mxu0
        %v1678 = vadd.f32 0.0, %v1677
        %v1679 = vpop.f32.mrf.mxu0
        %1680 = vmatprep.mubr.bf16.mxu0 0
        %1681 = vmatmul.mubr.bf16.gmra.mxu0 %v1633
        %v1682 = vpop.f32.mrf.mxu0
        %v1683 = vadd.f32 0.0, %v1682
        %v1684 = vpop.f32.mrf.mxu0
        %v1685 = vpop.f32.mrf.mxu0
        %v1686 = vadd.f32 0.0, %v1685
        %v1687 = vpop.f32.mrf.mxu0
        %1688 = vmatprep.mubr.bf16.mxu0 0
        %1689 = vmatmul.mubr.bf16.gmra.mxu0 %v1634
        %v1690 = vpop.f32.mrf.mxu0
        %v1691 = vadd.f32 0.0, %v1690
        %v1692 = vpop.f32.mrf.mxu0
        %v1693 = vpop.f32.mrf.mxu0
        %v1694 = vadd.f32 0.0, %v1693
        %v1695 = vpop.f32.mrf.mxu0
        %1696 = vmatprep.mubr.bf16.mxu0 0
        %1697 = vmatmul.mubr.bf16.gmra.mxu0 %v1635
        %v1698 = vpop.f32.mrf.mxu0
        %v1699 = vadd.f32 0.0, %v1698
        %v1700 = vpop.f32.mrf.mxu0
        %v1701 = vpop.f32.mrf.mxu0
        %v1702 = vadd.f32 0.0, %v1701
        %v1703 = vpop.f32.mrf.mxu0
        %1704 = vdwg.mxu0
        %1705 = vmatprep.subr.bf16.mxu0 0
        %1706 = vmatpush1.bf16.xpose.msra.mxu0 0
        %1707 = vmatprep.subr.bf16.mxu0 0
        %1708 = vmatpush1.bf16.xpose.msra.mxu0 0
        %1709 = vmatprep.subr.bf16.mxu0 0
        %1710 = vmatpush1.bf16.xpose.msra.mxu0 0
        %1711 = vmatprep.subr.bf16.mxu0 0
        %1712 = vmatpush1.bf16.xpose.msra.mxu0 0
        %1713 = vmatprep.subr.bf16.mxu0 0
        %1714 = vmatpush1.bf16.xpose.msra.mxu0 %v1639
        %1715 = vmatprep.subr.bf16.mxu0 0
        %1716 = vmatpush1.bf16.xpose.msra.mxu0 %v1638
        %1717 = vmatprep.subr.bf16.mxu0 0
        %1718 = vmatpush1.bf16.xpose.msra.mxu0 %v1637
        %1719 = vmatprep.subr.bf16.mxu0 0
        %1720 = vmatpush1.bf16.xpose.msra.mxu0 %v1636
        %1721 = vmatprep.subr.bf16.mxu0 0
        %1722 = vmatpush2.bf16.xpose.msra.mxu0 0
        %1723 = vmatprep.subr.bf16.mxu0 0
        %1724 = vmatpush2.bf16.xpose.msra.mxu0 0
        %1725 = vmatprep.subr.bf16.mxu0 0
        %1726 = vmatpush2.bf16.xpose.msra.mxu0 0
        %1727 = vmatprep.subr.bf16.mxu0 0
        %1728 = vmatpush2.bf16.xpose.msra.mxu0 0
        %1729 = vmatprep.subr.bf16.mxu0 0
        %1730 = vmatpush2.bf16.xpose.msra.mxu0 0
        %1731 = vmatprep.subr.bf16.mxu0 0
        %1732 = vmatpush2.bf16.xpose.msra.mxu0 0
        %1733 = vmatprep.subr.bf16.mxu0 0
        %1734 = vmatpush2.bf16.xpose.msra.mxu0 0
        %1735 = vmatprep.subr.bf16.mxu0 0
        %1736 = vmatpush2.bf16.xpose.msra.mxu0 0
        %1737 = vmatprep.mubr.bf16.mxu0 0
        %1738 = vmatmul.mubr.bf16.gmra.mxu0 %v1636
        %v1739 = vpop.f32.mrf.mxu0
        %v1740 = vadd.f32 0.0, %v1739
        %v1741 = vpop.f32.mrf.mxu0
        %v1742 = vpop.f32.mrf.mxu0
        %v1743 = vadd.f32 0.0, %v1742
        %v1744 = vpop.f32.mrf.mxu0
        %1745 = vmatprep.mubr.bf16.mxu0 0
        %1746 = vmatmul.mubr.bf16.gmra.mxu0 %v1637
        %v1747 = vpop.f32.mrf.mxu0
        %v1748 = vadd.f32 0.0, %v1747
        %v1749 = vpop.f32.mrf.mxu0
        %v1750 = vpop.f32.mrf.mxu0
        %v1751 = vadd.f32 0.0, %v1750
        %v1752 = vpop.f32.mrf.mxu0
        %1753 = vmatprep.mubr.bf16.mxu0 0
        %1754 = vmatmul.mubr.bf16.gmra.mxu0 %v1638
        %v1755 = vpop.f32.mrf.mxu0
        %v1756 = vadd.f32 0.0, %v1755
        %v1757 = vpop.f32.mrf.mxu0
        %v1758 = vpop.f32.mrf.mxu0
        %v1759 = vadd.f32 0.0, %v1758
        %v1760 = vpop.f32.mrf.mxu0
        %1761 = vmatprep.mubr.bf16.mxu0 0
        %1762 = vmatmul.mubr.bf16.gmra.mxu0 %v1639
        %v1763 = vpop.f32.mrf.mxu0
        %v1764 = vadd.f32 0.0, %v1763
        %v1765 = vpop.f32.mrf.mxu0
        %v1766 = vpop.f32.mrf.mxu0
        %v1767 = vadd.f32 0.0, %v1766
        %v1768 = vpop.f32.mrf.mxu0
        %1769 = vdwg.mxu0
        %v1770 = vxor.u32 %v1675, 2147483648
        %v1771 = vxor.u32 %v1678, 2147483648
        %v1772 = vxor.u32 %v1683, 2147483648
        %v1773 = vxor.u32 %v1686, 2147483648
        %v1774 = vxor.u32 %v1691, 2147483648
        %v1775 = vxor.u32 %v1694, 2147483648
        %v1776 = vxor.u32 %v1699, 2147483648
        %v1777 = vxor.u32 %v1702, 2147483648
        %v1778 = vxor.u32 %v1740, 2147483648
        %v1779 = vxor.u32 %v1743, 2147483648
        %v1780 = vxor.u32 %v1748, 2147483648
        %v1781 = vxor.u32 %v1751, 2147483648
        %v1782 = vxor.u32 %v1756, 2147483648
        %v1783 = vxor.u32 %v1759, 2147483648
        %v1784 = vxor.u32 %v1764, 2147483648
        %v1785 = vxor.u32 %v1767, 2147483648
        %v1786 = vmul.f32 %v1770, 1.442695
        %v1787 = vpow.pop %v1786
        %v1788 = vmul.f32 %v1771, 1.442695
        %v1789 = vpow.pop %v1788
        %v1790 = vmul.f32 %v1772, 1.442695
        %v1791 = vpow.pop %v1790
        %v1792 = vmul.f32 %v1773, 1.442695
        %v1793 = vpow.pop %v1792
        %v1794 = vmul.f32 %v1774, 1.442695
        %v1795 = vpow.pop %v1794
        %v1796 = vmul.f32 %v1775, 1.442695
        %v1797 = vpow.pop %v1796
        %v1798 = vmul.f32 %v1776, 1.442695
        %v1799 = vpow.pop %v1798
        %v1800 = vmul.f32 %v1777, 1.442695
        %v1801 = vpow.pop %v1800
        %v1802 = vmul.f32 %v1778, 1.442695
        %v1803 = vpow.pop %v1802
        %v1804 = vmul.f32 %v1779, 1.442695
        %v1805 = vpow.pop %v1804
        %v1806 = vmul.f32 %v1780, 1.442695
        %v1807 = vpow.pop %v1806
        %v1808 = vmul.f32 %v1781, 1.442695
        %v1809 = vpow.pop %v1808
        %v1810 = vmul.f32 %v1782, 1.442695
        %v1811 = vpow.pop %v1810
        %v1812 = vmul.f32 %v1783, 1.442695
        %v1813 = vpow.pop %v1812
        %v1814 = vmul.f32 %v1784, 1.442695
        %v1815 = vpow.pop %v1814
        %v1816 = vmul.f32 %v1785, 1.442695
        %v1817 = vpow.pop %v1816
        %v1818 = vadd.f32 %v1787, 1.0
        %v1819 = vadd.f32 %v1789, 1.0
        %v1820 = vadd.f32 %v1791, 1.0
        %v1821 = vadd.f32 %v1793, 1.0
        %v1822 = vadd.f32 %v1795, 1.0
        %v1823 = vadd.f32 %v1797, 1.0
        %v1824 = vadd.f32 %v1799, 1.0
        %v1825 = vadd.f32 %v1801, 1.0
        %v1826 = vadd.f32 %v1803, 1.0
        %v1827 = vadd.f32 %v1805, 1.0
        %v1828 = vadd.f32 %v1807, 1.0
        %v1829 = vadd.f32 %v1809, 1.0
        %v1830 = vadd.f32 %v1811, 1.0
        %v1831 = vadd.f32 %v1813, 1.0
        %v1832 = vadd.f32 %v1815, 1.0
        %v1833 = vadd.f32 %v1817, 1.0
        %v1834 = vrcp.pop %v1818
        %v1835 = vmul.f32 1.0, %v1834
        %v1836 = vrcp.pop %v1819
        %v1837 = vmul.f32 1.0, %v1836
        %v1838 = vrcp.pop %v1820
        %v1839 = vmul.f32 1.0, %v1838
        %v1840 = vrcp.pop %v1821
        %v1841 = vmul.f32 1.0, %v1840
        %v1842 = vrcp.pop %v1822
        %v1843 = vmul.f32 1.0, %v1842
        %v1844 = vrcp.pop %v1823
        %v1845 = vmul.f32 1.0, %v1844
        %v1846 = vrcp.pop %v1824
        %v1847 = vmul.f32 1.0, %v1846
        %v1848 = vrcp.pop %v1825
        %v1849 = vmul.f32 1.0, %v1848
        %v1850 = vrcp.pop %v1826
        %v1851 = vmul.f32 1.0, %v1850
        %v1852 = vrcp.pop %v1827
        %v1853 = vmul.f32 1.0, %v1852
        %v1854 = vrcp.pop %v1828
        %v1855 = vmul.f32 1.0, %v1854
        %v1856 = vrcp.pop %v1829
        %v1857 = vmul.f32 1.0, %v1856
        %v1858 = vrcp.pop %v1830
        %v1859 = vmul.f32 1.0, %v1858
        %v1860 = vrcp.pop %v1831
        %v1861 = vmul.f32 1.0, %v1860
        %v1862 = vrcp.pop %v1832
        %v1863 = vmul.f32 1.0, %v1862
        %v1864 = vrcp.pop %v1833
        %v1865 = vmul.f32 1.0, %v1864
        %v1866 = vpack.c.bf16 %v1837, %v1835
        %v1867 = vpack.c.bf16 %v1841, %v1839
        %v1868 = vpack.c.bf16 %v1845, %v1843
        %v1869 = vpack.c.bf16 %v1849, %v1847
        %v1870 = vpack.c.bf16 %v1853, %v1851
        %v1871 = vpack.c.bf16 %v1857, %v1855
        %v1872 = vpack.c.bf16 %v1861, %v1859
        %v1873 = vpack.c.bf16 %v1865, %v1863
        %v1882 = vunpack.c.l.b16 %v1866
        %v1883 = vunpack.c.h.b16 %v1866
        %v1884 = vunpack.c.l.b16 %v1867
        %v1885 = vunpack.c.h.b16 %v1867
        %v1886 = vunpack.c.l.b16 %v1868
        %v1887 = vunpack.c.h.b16 %v1868
        %v1888 = vunpack.c.l.b16 %v1869
        %v1889 = vunpack.c.h.b16 %v1869
        %v1890 = vunpack.c.l.b16 %v1870
        %v1891 = vunpack.c.h.b16 %v1870
        %v1892 = vunpack.c.l.b16 %v1871
        %v1893 = vunpack.c.h.b16 %v1871
        %v1894 = vunpack.c.l.b16 %v1872
        %v1895 = vunpack.c.h.b16 %v1872
        %v1896 = vunpack.c.l.b16 %v1873
        %v1897 = vunpack.c.h.b16 %v1873
        %v1898 = vpack.c.b16 %v1882, %v1882
        %v1899 = vpack.c.b16 %v1883, %v1883
        %v1900 = vpack.c.b16 %v1884, %v1884
        %v1901 = vpack.c.b16 %v1885, %v1885
        %v1902 = vpack.c.b16 %v1886, %v1886
        %v1903 = vpack.c.b16 %v1887, %v1887
        %v1904 = vpack.c.b16 %v1888, %v1888
        %v1905 = vpack.c.b16 %v1889, %v1889
        %v1906 = vpack.c.b16 %v1890, %v1890
        %v1907 = vpack.c.b16 %v1891, %v1891
        %v1908 = vpack.c.b16 %v1892, %v1892
        %v1909 = vpack.c.b16 %v1893, %v1893
        %v1910 = vpack.c.b16 %v1894, %v1894
        %v1911 = vpack.c.b16 %v1895, %v1895
        %v1912 = vpack.c.b16 %v1896, %v1896
        %v1913 = vpack.c.b16 %v1897, %v1897
        %vm1930 = vcmask 519168
        %1931 = vst.msk [vmem:[%s395] sm:$0xf] %vm1930, %v1898
        %1932 = vst.msk [vmem:[%s395 + $0x4] sm:$0xf] %vm1930, %v1899
        %1933 = vst.msk [vmem:[%s395 + $0x8] sm:$0xf] %vm1930, %v1900
        %1934 = vst.msk [vmem:[%s395 + $0xc] sm:$0xf] %vm1930, %v1901
        %1935 = vst.msk [vmem:[%s395 + $0x10] sm:$0xf] %vm1930, %v1902
        %1936 = vst.msk [vmem:[%s395 + $0x14] sm:$0xf] %vm1930, %v1903
        %1937 = vst.msk [vmem:[%s395 + $0x18] sm:$0xf] %vm1930, %v1904
        %1938 = vst.msk [vmem:[%s395 + $0x1c] sm:$0xf] %vm1930, %v1905
        %1939 = vst.msk [vmem:[%s395 + $0x20] sm:$0xf] %vm1930, %v1906
        %1940 = vst.msk [vmem:[%s395 + $0x24] sm:$0xf] %vm1930, %v1907
        %1941 = vst.msk [vmem:[%s395 + $0x28] sm:$0xf] %vm1930, %v1908
        %1942 = vst.msk [vmem:[%s395 + $0x2c] sm:$0xf] %vm1930, %v1909
        %1943 = vst.msk [vmem:[%s395 + $0x30] sm:$0xf] %vm1930, %v1910
        %1944 = vst.msk [vmem:[%s395 + $0x34] sm:$0xf] %vm1930, %v1911
        %1945 = vst.msk [vmem:[%s395 + $0x38] sm:$0xf] %vm1930, %v1912
        %1946 = vst.msk [vmem:[%s395 + $0x3c] sm:$0xf] %vm1930, %v1913
        %s1947 = sand.u32 %s198, 1
        %s1948 = scalar_lea.sflag [#allocation3], %s1947
        %s1949 = sand.u32 %s198, 1
        %s1950 = smul.addr %s1949, 64
        %s1951 = scalar_lea.vmem [#allocation2], %s1950
        %s1952 = sand.u32 %s28, 1
        %s1953 = scalar_lea.sflag [#allocation5], %s1952
        %s1954 = sand.u32 %s224, 1
        %s1955 = smul.addr %s1954, 128
        %s1956 = scalar_lea.vmem [#allocation4], %s1955
        %s1957 = sand.u32 %s28, 1
        %s1958 = scalar_lea.sflag [#allocation5], %s1957
        %s1959 = sand.u32 %s250, 1
        %s1960 = smul.addr %s1959, 128
        %s1961 = scalar_lea.vmem [#allocation6], %s1960
        %s1962 = smul.u32 2, %s28
        %p1963 = scmp.lt.s32.totalorder %s1962, 3
        %s1964 = scalar_select %p1963, %s1962, 3
        %s1965 = scalar_lea.vmem %s10, %s1964
        // Predicated region
        $region49: #{vgae_forward_batched.1} parent=47 // pred_check
          %p1966 = pneg %p208
        $region50: #{vgae_forward_batched.1} parent=47 // pred_check_branch
          %1968 = sbr.rel (%p1966) target = $region52
        $region51: #{vgae_forward_batched.1} parent=47 // pred_region
          %s1969 = smul.u32 2, %s28
          %s1971 = ssub.s32 1024, 1024
          %1972 = vsyncadd %s1948, %s1971
          %s1973 = smul.addr %s1969, 8
          %s1974 = smul.addr %s1973, 64
          %s1975 = scalar_lea.hbm %s7, %s1974
          %s1976 = sshll.u32 %s1951, 4
          %s1977 = int_to_ptr.vmem [resolvable:$true] %s1976
          %1982 = dma.vmem_to_hbm [thread:$0]  %s1977, 1024, %s1975, %s1948, 64, 64, 4
        $region52: #{vgae_forward_batched.1} parent=47 // pred_fallthru
          _
        // Predicated region
        $region53: #{vgae_forward_batched.1} parent=47 // pred_check
          %p1983 = pneg %p234
        $region54: #{vgae_forward_batched.1} parent=47 // pred_check_branch
          %1985 = sbr.rel (%p1983) target = $region56
        $region55: #{vgae_forward_batched.1} parent=47 // pred_region
          %s1986 = smul.u32 2, %s28
          %s1988 = ssub.s32 2048, 2048
          %1989 = vsyncadd %s1953, %s1988
          %s1990 = smul.addr %s1986, 8
          %s1991 = smul.addr %s1990, 128
          %s1992 = scalar_lea.hbm %s8, %s1991
          %s1993 = sshll.u32 %s1956, 4
          %s1994 = int_to_ptr.vmem [resolvable:$true] %s1993
          %1999 = dma.vmem_to_hbm [thread:$0]  %s1994, 2048, %s1992, %s1953, 128, 128, 8
        $region56: #{vgae_forward_batched.1} parent=47 // pred_fallthru
          _
        // Predicated region
        $region57: #{vgae_forward_batched.1} parent=47 // pred_check
          %p2000 = pneg %p260
        $region58: #{vgae_forward_batched.1} parent=47 // pred_check_branch
          %2002 = sbr.rel (%p2000) target = $region60
        $region59: #{vgae_forward_batched.1} parent=47 // pred_region
          %s2003 = smul.u32 2, %s28
          %s2005 = ssub.s32 2048, 2048
          %2006 = vsyncadd %s1958, %s2005
          %s2007 = smul.addr %s2003, 8
          %s2008 = smul.addr %s2007, 128
          %s2009 = scalar_lea.hbm %s9, %s2008
          %s2010 = sshll.u32 %s1961, 4
          %s2011 = int_to_ptr.vmem [resolvable:$true] %s2010
          %2016 = dma.vmem_to_hbm [thread:$0]  %s2011, 2048, %s2009, %s1958, 128, 128, 8
        $region60: #{vgae_forward_batched.1} parent=47 // pred_fallthru
          _
        // Predicated region
        $region61: #{vgae_forward_batched.1} parent=47 // pred_check
          %p2017 = pneg %p286
        $region62: #{vgae_forward_batched.1} parent=47 // pred_check_branch
          %2019 = sbr.rel (%p2017) target = $region64
        $region63: #{vgae_forward_batched.1} parent=47 // pred_region
          %s2020 = smul.u32 2, %s28
        $region64: #{vgae_forward_batched.1} parent=47 // pred_fallthru
          _
      $region48: #{vgae_forward_batched.1} parent=5 // pred_fallthru
        _
      %p2021 = scmp.le.s32.totalorder 2, %s23
      // Predicated region
      $region65: #{vgae_forward_batched.1} parent=5 // pred_check
        %p2022 = pneg %p2021
      $region66: #{vgae_forward_batched.1} parent=5 // pred_check_branch
        %2024 = sbr.rel (%p2022) target = $region68
      $region67: #{vgae_forward_batched.1} parent=5 // pred_region
        %s2025 = ssub.s32 %s23, 2
        // Predicated region
        $region69: #{vgae_forward_batched.1} parent=67 // pred_check
          %p2026 = pneg %p214
        $region70: #{vgae_forward_batched.1} parent=67 // pred_check_branch
          %2028 = sbr.rel (%p2026) target = $region72
        $region71: #{vgae_forward_batched.1} parent=67 // pred_region
          %s2029 = sand.u32 %s199, 1
          %s2030 = scalar_lea.sflag [#allocation3], %s2029
          %s2031 = sand.u32 %s199, 1
          %s2032 = smul.addr %s2031, 64
          %s2033 = scalar_lea.vmem [#allocation2], %s2032
          %2034 = dma.done %s2030, 1024
        $region72: #{vgae_forward_batched.1} parent=67 // pred_fallthru
          _
        // Predicated region
        $region73: #{vgae_forward_batched.1} parent=67 // pred_check
          %p2035 = pneg %p240
        $region74: #{vgae_forward_batched.1} parent=67 // pred_check_branch
          %2037 = sbr.rel (%p2035) target = $region76
        $region75: #{vgae_forward_batched.1} parent=67 // pred_region
          %s2038 = sand.u32 %s29, 1
          %s2039 = scalar_lea.sflag [#allocation5], %s2038
          %s2040 = sand.u32 %s225, 1
          %s2041 = smul.addr %s2040, 128
          %s2042 = scalar_lea.vmem [#allocation4], %s2041
          %2043 = dma.done %s2039, 2048
        $region76: #{vgae_forward_batched.1} parent=67 // pred_fallthru
          _
        // Predicated region
        $region77: #{vgae_forward_batched.1} parent=67 // pred_check
          %p2044 = pneg %p266
        $region78: #{vgae_forward_batched.1} parent=67 // pred_check_branch
          %2046 = sbr.rel (%p2044) target = $region80
        $region79: #{vgae_forward_batched.1} parent=67 // pred_region
          %s2047 = sand.u32 %s29, 1
          %s2048 = scalar_lea.sflag [#allocation5], %s2047
          %s2049 = sand.u32 %s251, 1
          %s2050 = smul.addr %s2049, 128
          %s2051 = scalar_lea.vmem [#allocation6], %s2050
          %2052 = dma.done %s2048, 2048
        $region80: #{vgae_forward_batched.1} parent=67 // pred_fallthru
          _
        // Predicated region
        $region81: #{vgae_forward_batched.1} parent=67 // pred_check
          %p2053 = pneg %p292
        $region82: #{vgae_forward_batched.1} parent=67 // pred_check_branch
          %2055 = sbr.rel (%p2053) target = $region84
        $region83: #{vgae_forward_batched.1} parent=67 // pred_region
          %s2056 = smul.u32 2, %s29
          %p2057 = scmp.lt.s32.totalorder %s2056, 3
          %s2058 = scalar_select %p2057, %s2056, 3
          %s2059 = scalar_lea.vmem %s10, %s2058
        $region84: #{vgae_forward_batched.1} parent=67 // pred_fallthru
          _
      $region68: #{vgae_forward_batched.1} parent=5 // pred_fallthru
        _
    $region6: #{vgae_forward_batched.1} parent=1 // loop_footer
      %s27 = sadd.s32 1, %s23
    $region7: #{vgae_forward_batched.1} parent=1 // loop_footer_branch
      %22 = sbr.rel target = $region3
    $region8: #{vgae_forward_batched.1} parent=1 // loop_exit
      _
    %2060 = vsyncpa [#allocation3], 1
    %s2061 = scalar_lea.sflag [#allocation3], 1
    %2062 = vsyncpa %s2061, 1
    %2063 = vsyncpa [#allocation5], 1
    %s2064 = scalar_lea.sflag [#allocation5], 1
    %2065 = vsyncpa %s2064, 1

</llo_original>
